<compile_context>
chip_gen: v5e
topology: v5e:2x2
jax: 0.10.0
libtpu: 0.0.40
codegen_flags: <defaults>
</compile_context>

<pallas_src>
import jax
import jax.numpy as jnp
from jax import lax
from jax.experimental import pallas as pl
from jax.experimental.pallas import tpu as pltpu


def _lstm_gates(g, hs):
    """Full-width sigmoid+tanh with lane-mask select; slice only for recombine."""
    lane = lax.broadcasted_iota(jnp.int32, g.shape, dimension=1)
    is_a = (lane >= 2 * hs) & (lane < 3 * hs)
    act = jnp.where(is_a, jnp.tanh(g), jax.nn.sigmoid(g))
    return (act[:, 0 * hs:1 * hs], act[:, 1 * hs:2 * hs],
            act[:, 2 * hs:3 * hs], act[:, 3 * hs:4 * hs])


def seq_double_att_kernel(tlen_ref,                     # SMEM (1,) true T
                          gx_ref,                       # (Tc, B, 4H) streamed x@wih1+b1
                          whh1_ref,                     # (H, 4H)
                          w2_ref, b2_ref,               # (H+H2, 4H2) (1, 4H2) stacked LSTM2
                          wlin_ref, blin_ref,           # (1, H2) (1, 1)
                          wout_ref, bout_ref,           # (H2, 1) (1, 1)
                          out_ref,                      # (B, 1)
                          h2seq_scr,                    # VMEM (Tc, B, H2) per-chunk h2
                          h1_scr, c1_scr,               # VMEM (B, H)
                          h2_scr, c2_scr, acc_scr,      # VMEM (B, H2)
                          m_scr, l_scr):                # VMEM (B, 1)
    Tc, B, _ = gx_ref.shape
    H = whh1_ref.shape[0]
    H2 = h2_scr.shape[1]
    t0 = pl.program_id(0)
    n_chunks = pl.num_programs(0)

    # ---- initialize carried state on the first time-chunk ----
    @pl.when(t0 == 0)
    def _init():
        h1_scr[...] = jnp.zeros_like(h1_scr)
        c1_scr[...] = jnp.zeros_like(c1_scr)
        h2_scr[...] = jnp.zeros_like(h2_scr)
        c2_scr[...] = jnp.zeros_like(c2_scr)
        acc_scr[...] = jnp.zeros_like(acc_scr)
        m_scr[...] = jnp.full_like(m_scr, -1e30)
        l_scr[...] = jnp.zeros_like(l_scr)

    # ---- hoist weight/bias loads out of the recurrent loop ----
    whh1 = whh1_ref[...]
    w2 = w2_ref[...]
    b2 = b2_ref[...]

    # ---- serial recurrence: only the two recurrent matmuls + gates + one vst ----
    def body(t, carry):
        h1, c1, h2, c2 = carry

        # LSTM1: input projection precomputed; only h1 @ whh1 on the chain.
        g1 = gx_ref[t] + jnp.dot(h1, whh1, preferred_element_type=jnp.float32)
        i1, f1, a1, o1 = _lstm_gates(g1, H)
        c1 = f1 * c1 + i1 * a1
        h1 = o1 * jnp.tanh(c1)

        # LSTM2: single fused matmul with stacked [wih2; whh2].
        hcat = jnp.concatenate([h1, h2], axis=-1)            # (B, H+H2)
        g2 = jnp.dot(hcat, w2, preferred_element_type=jnp.float32) + b2
        i2, f2, a2, o2 = _lstm_gates(g2, H2)
        c2 = f2 * c2 + i2 * a2
        h2 = o2 * jnp.tanh(c2)

        # Attention work deferred: just stash h2_t for the batched chunk pass.
        h2seq_scr[t] = h2
        return h1, c1, h2, c2

    carry0 = (h1_scr[...], c1_scr[...], h2_scr[...], c2_scr[...])
    unroll = True if Tc <= 16 else 8
    h1, c1, h2, c2 = lax.fori_loop(0, Tc, body, carry0, unroll=unroll)

    # persist recurrent state for the next time-chunk
    h1_scr[...] = h1
    c1_scr[...] = c1
    h2_scr[...] = h2
    c2_scr[...] = c2

    # ---- batched per-chunk attention score + online-softmax merge ----
    h2_chunk = h2seq_scr[...]                                  # (Tc, B, H2)
    e = jnp.tanh(jnp.sum(h2_chunk * wlin_ref[...], axis=-1, keepdims=True)
                 + blin_ref[...])                              # (Tc, B, 1)

    # mask padded tail steps (true T comes from scalar prefetch)
    t_true = tlen_ref[0]
    step_idx = t0 * Tc + lax.broadcasted_iota(jnp.int32, (Tc, B, 1), 0)
    valid = step_idx < t_true                                  # bool (Tc, B, 1)
    e = jnp.where(valid, e, jnp.float32(-1e30))

    m_prev = m_scr[...]
    l_prev = l_scr[...]
    acc_prev = acc_scr[...]

    m_new = jnp.maximum(m_prev, jnp.max(e, axis=0))            # (B, 1)
    scale = jnp.exp(m_prev - m_new)                            # (B, 1)
    p = jnp.exp(e - m_new) * valid.astype(jnp.float32)         # (Tc, B, 1)
    l_new = scale * l_prev + jnp.sum(p, axis=0)                # (B, 1)
    acc_new = scale * acc_prev + jnp.sum(p * h2_chunk, axis=0) # (B, H2)

    m_scr[...] = m_new
    l_scr[...] = l_new
    acc_scr[...] = acc_new

    # ---- finalize: att = acc / (l * T_true);  res = att @ wout + bout ----
    @pl.when(t0 == n_chunks - 1)
    def _finalize():
        denom = l_new * t_true.astype(jnp.float32)
        att = acc_new / denom                                  # exact divide
        out_ref[...] = (jnp.dot(att, wout_ref[...],
                                preferred_element_type=jnp.float32)
                        + bout_ref[...])


def _pick_time_chunk(T, B_pad, H, H2, budget_bytes=8 << 20, cap=512):
    """Pick Tc from a VMEM budget: double-buffered (Tc,B,4H) stream + (Tc,B,H2) scratch."""
    per_t = B_pad * (2 * 4 * H + H2) * 4
    tc = max(1, budget_bytes // per_t)
    return int(max(1, min(tc, cap, T)))


def sequence_double_att(x, params, *, time_chunk=None):
    """x: (B, T, F) float32 (PyTorch batch_first convention). Returns (B, 1)."""
    B, T, F = x.shape
    H = params["whh1"].shape[0]
    H2 = params["whh2"].shape[0]

    # Pad batch to the f32 sublane multiple (8); keep batch in a single block
    # (extra rows ride the same latency-bound MXU pushes essentially for free).
    B_pad = max(8, ((B + 7) // 8) * 8)
    if B_pad != B:
        x = jnp.pad(x, ((0, B_pad - B), (0, 0), (0, 0)))

    # Hoisted LSTM1 input projection: one lane-dense XLA matmul outside the kernel.
    gx = jnp.einsum("btf,fg->btg", x, params["wih1"]) + params["b1"]   # (B_pad, T, 4H)
    gxt = jnp.transpose(gx, (1, 0, 2)).astype(jnp.float32)             # (T, B_pad, 4H)

    if time_chunk is not None:
        Tc = max(1, int(time_chunk))
    else:
        Tc = _pick_time_chunk(T, B_pad, H, H2)
    T_pad = ((T + Tc - 1) // Tc) * Tc
    if T_pad != T:
        gxt = jnp.pad(gxt, ((0, T_pad - T), (0, 0), (0, 0)))
    n_chunks = T_pad // Tc

    # Stack LSTM2 weights so the per-step recurrence is one MXU matmul.
    w2 = jnp.concatenate([params["wih2"], params["whh2"]], axis=0)     # (H+H2, 4H2)
    wlin_row = params["wlin"].reshape(1, H2)
    tlen = jnp.array([T], jnp.int32)

    def full(shape):
        nd = len(shape)
        return pl.BlockSpec(shape, lambda t, s, _nd=nd: (0,) * _nd)

    grid_spec = pltpu.PrefetchScalarGridSpec(
        num_scalar_prefetch=1,
        grid=(n_chunks,),
        in_specs=[
            # gate inputs stream HBM->VMEM one time-chunk per grid step
            pl.BlockSpec((Tc, B_pad, 4 * H), lambda t, s: (t, 0, 0)),
            full(params["whh1"].shape),
            full(w2.shape), full(params["b2"].shape),
            full(wlin_row.shape), full(params["blin"].shape),
            full(params["wout"].shape), full(params["bout"].shape),
        ],
        out_specs=pl.BlockSpec((B_pad, 1), lambda t, s: (0, 0)),
        scratch_shapes=[
            pltpu.VMEM((Tc, B_pad, H2), jnp.float32),   # h2 per chunk (batched attention)
            pltpu.VMEM((B_pad, H), jnp.float32),        # h1
            pltpu.VMEM((B_pad, H), jnp.float32),        # c1
            pltpu.VMEM((B_pad, H2), jnp.float32),       # h2
            pltpu.VMEM((B_pad, H2), jnp.float32),       # c2
            pltpu.VMEM((B_pad, H2), jnp.float32),       # acc (online softmax)
            pltpu.VMEM((B_pad, 1), jnp.float32),        # m   (running max)
            pltpu.VMEM((B_pad, 1), jnp.float32),        # l   (running denom)
        ],
    )

    out = pl.pallas_call(
        seq_double_att_kernel,
        out_shape=jax.ShapeDtypeStruct((B_pad, 1), jnp.float32),
        grid_spec=grid_spec,
        compiler_params=pltpu.CompilerParams(
            dimension_semantics=("arbitrary",),   # time axis is sequential
            vmem_limit_bytes=32 * 1024 * 1024,    # safe on v5e/v6e/v7x
        ),
    )(tlen, gxt,
      params["whh1"], w2, params["b2"],
      wlin_row, params["blin"],
      params["wout"], params["bout"])
    return out[:B]


def make_params(key, nb_features, hidden_size):
    """Deterministic synthetic parameters with PyTorch LSTM shapes (pre-transposed)."""
    H, F = hidden_size, nb_features
    H2 = 2 * H
    ks = jax.random.split(key, 12)
    s1 = 1.0 / jnp.sqrt(H)
    s2 = 1.0 / jnp.sqrt(H2)

    def u(k, shape, s):
        return jax.random.uniform(k, shape, jnp.float32, -s, s)

    # LSTM1: weight_ih (4H, F), weight_hh (4H, H), biases (4H,)  -> transposed
    wih1 = u(ks[0], (4 * H, F), s1).T
    whh1 = u(ks[1], (4 * H, H), s1).T
    b1 = (u(ks[2], (4 * H,), s1) + u(ks[3], (4 * H,), s1)).reshape(1, 4 * H)
    # LSTM2: weight_ih (4*2H, H), weight_hh (4*2H, 2H), biases (4*2H,)
    wih2 = u(ks[4], (4 * H2, H), s2).T
    whh2 = u(ks[5], (4 * H2, H2), s2).T
    b2 = (u(ks[6], (4 * H2,), s2) + u(ks[7], (4 * H2,), s2)).reshape(1, 4 * H2)
    # lin / lin_out: weight (1, 2H), bias (1,)
    wlin = u(ks[8], (1, H2), s2).T
    blin = u(ks[9], (1,), s2).reshape(1, 1)
    wout = u(ks[10], (1, H2), s2).T
    bout = u(ks[11], (1,), s2).reshape(1, 1)
    return dict(wih1=wih1, whh1=whh1, b1=b1,
                wih2=wih2, whh2=whh2, b2=b2,
                wlin=wlin, blin=blin, wout=wout, bout=bout)


def reference_forward(x, p):
    """Pure-JAX reference mirroring the PyTorch forward pass."""
    B, T, F = x.shape
    H = p["whh1"].shape[0]
    H2 = p["whh2"].shape[0]

    def cell(x_t, h, c, wih, whh, b, hs):
        gates = x_t @ wih + h @ whh + b
        i = jax.nn.sigmoid(gates[:, :hs])
        f = jax.nn.sigmoid(gates[:, hs:2 * hs])
        g = jnp.tanh(gates[:, 2 * hs:3 * hs])
        o = jax.nn.sigmoid(gates[:, 3 * hs:])
        c = f * c + i * g
        h = o * jnp.tanh(c)
        return h, c

    def step(carry, x_t):
        h1, c1, h2, c2 = carry
        h1, c1 = cell(x_t, h1, c1, p["wih1"], p["whh1"], p["b1"], H)
        h2, c2 = cell(h1, h2, c2, p["wih2"], p["whh2"], p["b2"], H2)
        return (h1, c1, h2, c2), h2

    init = (jnp.zeros((B, H)), jnp.zeros((B, H)),
            jnp.zeros((B, H2)), jnp.zeros((B, H2)))
    _, h2_all = lax.scan(step, init, jnp.transpose(x, (1, 0, 2)))  # (T, B, 2H)
    lstm2_out = jnp.transpose(h2_all, (1, 0, 2))                    # (B, T, 2H)
    e = jnp.tanh(lstm2_out.reshape(-1, H2) @ p["wlin"]
                 + p["blin"]).reshape(B, T, 1)
    w = jax.nn.softmax(e, axis=1)
    att = jnp.mean(lstm2_out * w, axis=1)                           # (B, 2H)
    return att @ p["wout"] + p["bout"]                              # (B, 1)


if __name__ == "__main__":
    key = jax.random.PRNGKey(0)
    k_x, k_p, k_x2 = jax.random.split(key, 3)

    # Case 1: small single-chunk run.
    B, T, F, H = 4, 8, 4, 32
    params = make_params(k_p, F, H)
    x = jax.random.normal(k_x, (B, T, F), jnp.float32)
    out = jax.block_until_ready(sequence_double_att(x, params))
    ref = jax.block_until_ready(reference_forward(x, params))
    assert out.shape == (B, 1)
    assert jnp.allclose(out, ref, atol=1e-2, rtol=1e-2), (out, ref)

    # Case 2: non-divisible T with a small forced time-chunk -> exercises
    # multi-chunk streaming, the online-softmax merge, and the masked tail.
    B2, T2 = 2, 13
    x2 = jax.random.normal(k_x2, (B2, T2, F), jnp.float32)
    out2 = jax.block_until_ready(sequence_double_att(x2, params, time_chunk=4))
    ref2 = jax.block_until_ready(reference_forward(x2, params))
    assert out2.shape == (B2, 1)
    assert jnp.allclose(out2, ref2, atol=1e-2, rtol=1e-2), (out2, ref2)

    print("KERNEL_OK")
</pallas_src>

<mosaic_0001>
module attributes {stable_mosaic.version = 11 : i64} {
  func.func @seq_double_att_kernel(%arg0: i32, %arg1: memref<1xi32, #tpu.memory_space<smem>>, %arg2: memref<8x8x128xf32, #tpu.memory_space<vmem>>, %arg3: memref<32x128xf32, #tpu.memory_space<vmem>>, %arg4: memref<96x256xf32, #tpu.memory_space<vmem>>, %arg5: memref<1x256xf32, #tpu.memory_space<vmem>>, %arg6: memref<1x64xf32, #tpu.memory_space<vmem>>, %arg7: memref<1x1xf32, #tpu.memory_space<vmem>>, %arg8: memref<64x1xf32, #tpu.memory_space<vmem>>, %arg9: memref<1x1xf32, #tpu.memory_space<vmem>>, %arg10: memref<8x1xf32, #tpu.memory_space<vmem>>, %arg11: memref<8x8x64xf32, #tpu.memory_space<vmem>>, %arg12: memref<8x32xf32, #tpu.memory_space<vmem>>, %arg13: memref<8x32xf32, #tpu.memory_space<vmem>>, %arg14: memref<8x64xf32, #tpu.memory_space<vmem>>, %arg15: memref<8x64xf32, #tpu.memory_space<vmem>>, %arg16: memref<8x64xf32, #tpu.memory_space<vmem>>, %arg17: memref<8x1xf32, #tpu.memory_space<vmem>>, %arg18: memref<8x1xf32, #tpu.memory_space<vmem>>) attributes {dimension_semantics = [#tpu.dimension_semantics<arbitrary>], iteration_bounds = array<i64: 1>, scalar_prefetch = 1 : i64, scratch_operands = 8 : i64, tpu.core_type = #tpu.core_type<tc>, window_params = [{transform_indices = @transform_0, window_bounds = array<i64: 8, 8, 128>}, {pipeline_mode = #tpu.pipeline_mode<synchronous>, transform_indices = @transform_1, window_bounds = array<i64: 32, 128>}, {pipeline_mode = #tpu.pipeline_mode<synchronous>, transform_indices = @transform_2, window_bounds = array<i64: 96, 256>}, {pipeline_mode = #tpu.pipeline_mode<synchronous>, transform_indices = @transform_3, window_bounds = array<i64: 1, 256>}, {pipeline_mode = #tpu.pipeline_mode<synchronous>, transform_indices = @transform_4, window_bounds = array<i64: 1, 64>}, {pipeline_mode = #tpu.pipeline_mode<synchronous>, transform_indices = @transform_5, window_bounds = array<i64: 1, 1>}, {pipeline_mode = #tpu.pipeline_mode<synchronous>, transform_indices = @transform_6, window_bounds = array<i64: 64, 1>}, {pipeline_mode = #tpu.pipeline_mode<synchronous>, transform_indices = @transform_7, window_bounds = array<i64: 1, 1>}, {pipeline_mode = #tpu.pipeline_mode<synchronous>, transform_indices = @transform_8, window_bounds = array<i64: 8, 1>}]} {
    %c0_i32 = arith.constant 0 : i32
    %0 = arith.cmpi eq, %arg0, %c0_i32 : i32
    %1 = arith.extui %0 : i1 to i32
    %c0_i32_0 = arith.constant 0 : i32
    %2 = arith.cmpi ne, %1, %c0_i32_0 : i32
    scf.if %2 {
      %cst_142 = arith.constant 0.000000e+00 : f32
      %520 = vector.broadcast %cst_142 : f32 to vector<8x32xf32>
      %c0_143 = arith.constant 0 : index
      %c0_144 = arith.constant 0 : index
      %521 = vector.load %arg12[%c0_143, %c0_144] : memref<8x32xf32, #tpu.memory_space<vmem>>, vector<8x32xf32>
      tpu.vector_store %arg12[%c0_143, %c0_144], %520 {strides = array<i32>} : memref<8x32xf32, #tpu.memory_space<vmem>>, vector<8x32xf32>,
      %cst_145 = arith.constant 0.000000e+00 : f32
      %522 = vector.broadcast %cst_145 : f32 to vector<8x32xf32>
      %c0_146 = arith.constant 0 : index
      %c0_147 = arith.constant 0 : index
      %523 = vector.load %arg13[%c0_146, %c0_147] : memref<8x32xf32, #tpu.memory_space<vmem>>, vector<8x32xf32>
      tpu.vector_store %arg13[%c0_146, %c0_147], %522 {strides = array<i32>} : memref<8x32xf32, #tpu.memory_space<vmem>>, vector<8x32xf32>,
      %cst_148 = arith.constant 0.000000e+00 : f32
      %524 = vector.broadcast %cst_148 : f32 to vector<8x64xf32>
      %c0_149 = arith.constant 0 : index
      %c0_150 = arith.constant 0 : index
      %525 = vector.load %arg14[%c0_149, %c0_150] : memref<8x64xf32, #tpu.memory_space<vmem>>, vector<8x64xf32>
      tpu.vector_store %arg14[%c0_149, %c0_150], %524 {strides = array<i32>} : memref<8x64xf32, #tpu.memory_space<vmem>>, vector<8x64xf32>,
      %cst_151 = arith.constant 0.000000e+00 : f32
      %526 = vector.broadcast %cst_151 : f32 to vector<8x64xf32>
      %c0_152 = arith.constant 0 : index
      %c0_153 = arith.constant 0 : index
      %527 = vector.load %arg15[%c0_152, %c0_153] : memref<8x64xf32, #tpu.memory_space<vmem>>, vector<8x64xf32>
      tpu.vector_store %arg15[%c0_152, %c0_153], %526 {strides = array<i32>} : memref<8x64xf32, #tpu.memory_space<vmem>>, vector<8x64xf32>,
      %cst_154 = arith.constant 0.000000e+00 : f32
      %528 = vector.broadcast %cst_154 : f32 to vector<8x64xf32>
      %c0_155 = arith.constant 0 : index
      %c0_156 = arith.constant 0 : index
      %529 = vector.load %arg16[%c0_155, %c0_156] : memref<8x64xf32, #tpu.memory_space<vmem>>, vector<8x64xf32>
      tpu.vector_store %arg16[%c0_155, %c0_156], %528 {strides = array<i32>} : memref<8x64xf32, #tpu.memory_space<vmem>>, vector<8x64xf32>,
      %cst_157 = arith.constant -1.000000e+30 : f32
      %530 = vector.broadcast %cst_157 : f32 to vector<8x1xf32>
      %c0_158 = arith.constant 0 : index
      %c0_159 = arith.constant 0 : index
      %531 = vector.load %arg17[%c0_158, %c0_159] : memref<8x1xf32, #tpu.memory_space<vmem>>, vector<8x1xf32>
      tpu.vector_store %arg17[%c0_158, %c0_159], %530 {strides = array<i32>} : memref<8x1xf32, #tpu.memory_space<vmem>>, vector<8x1xf32>,
      %cst_160 = arith.constant 0.000000e+00 : f32
      %532 = vector.broadcast %cst_160 : f32 to vector<8x1xf32>
      %c0_161 = arith.constant 0 : index
      %c0_162 = arith.constant 0 : index
      %533 = vector.load %arg18[%c0_161, %c0_162] : memref<8x1xf32, #tpu.memory_space<vmem>>, vector<8x1xf32>
      tpu.vector_store %arg18[%c0_161, %c0_162], %532 {strides = array<i32>} : memref<8x1xf32, #tpu.memory_space<vmem>>, vector<8x1xf32>,
    } else {
    }
    %c0 = arith.constant 0 : index
    %c0_1 = arith.constant 0 : index
    %3 = vector.load %arg3[%c0, %c0_1] : memref<32x128xf32, #tpu.memory_space<vmem>>, vector<32x128xf32>
    %c0_2 = arith.constant 0 : index
    %c0_3 = arith.constant 0 : index
    %4 = vector.load %arg4[%c0_2, %c0_3] : memref<96x256xf32, #tpu.memory_space<vmem>>, vector<96x256xf32>
    %c0_4 = arith.constant 0 : index
    %c0_5 = arith.constant 0 : index
    %5 = vector.load %arg5[%c0_4, %c0_5] : memref<1x256xf32, #tpu.memory_space<vmem>>, vector<1x256xf32>
    %c0_6 = arith.constant 0 : index
    %c0_7 = arith.constant 0 : index
    %6 = vector.load %arg12[%c0_6, %c0_7] : memref<8x32xf32, #tpu.memory_space<vmem>>, vector<8x32xf32>
    %c0_8 = arith.constant 0 : index
    %c0_9 = arith.constant 0 : index
    %7 = vector.load %arg13[%c0_8, %c0_9] : memref<8x32xf32, #tpu.memory_space<vmem>>, vector<8x32xf32>
    %c0_10 = arith.constant 0 : index
    %c0_11 = arith.constant 0 : index
    %8 = vector.load %arg14[%c0_10, %c0_11] : memref<8x64xf32, #tpu.memory_space<vmem>>, vector<8x64xf32>
    %c0_12 = arith.constant 0 : index
    %c0_13 = arith.constant 0 : index
    %9 = vector.load %arg15[%c0_12, %c0_13] : memref<8x64xf32, #tpu.memory_space<vmem>>, vector<8x64xf32>
    %c0_i32_14 = arith.constant 0 : i32
    %10 = arith.index_cast %c0_i32_14 : i32 to index
    %c0_15 = arith.constant 0 : index
    %c0_16 = arith.constant 0 : index
    %11 = vector.load %arg2[%10, %c0_15, %c0_16] : memref<8x8x128xf32, #tpu.memory_space<vmem>>, vector<1x8x128xf32>
    %12 = vector.shape_cast %11 : vector<1x8x128xf32> to vector<8x128xf32>
    %cst = arith.constant dense<0.000000e+00> : vector<8x128xf32>
    %13 = tpu.matmul %6, %3, %cst {dimension_numbers = #tpu.dot_dimension_numbers<[1], [0], [0], [1], [0, 0, 1, 1], [], []>} : vector<8x32xf32>, vector<32x128xf32>, vector<8x128xf32> -> vector<8x128xf32>
    %14 = arith.addf %12, %13 : vector<8x128xf32>
    %15 = tpu.iota {dimensions = array<i32: 1>} : vector<8x128xi32>
    %c64_i32 = arith.constant 64 : i32
    %16 = vector.broadcast %c64_i32 : i32 to vector<8x128xi32>
    %17 = arith.cmpi sge, %15, %16 : vector<8x128xi32>
    %c96_i32 = arith.constant 96 : i32
    %18 = vector.broadcast %c96_i32 : i32 to vector<8x128xi32>
    %19 = arith.cmpi slt, %15, %18 : vector<8x128xi32>
    %20 = arith.andi %17, %19 : vector<8x128xi1>
    %21 = math.tanh %14 : vector<8x128xf32>
    %22 = arith.negf %14 : vector<8x128xf32>
    %23 = math.exp %22 : vector<8x128xf32>
    %cst_17 = arith.constant 1.000000e+00 : f32
    %24 = vector.broadcast %cst_17 : f32 to vector<8x128xf32>
    %25 = arith.addf %24, %23 : vector<8x128xf32>
    %26 = arith.divf %24, %25 : vector<8x128xf32>
    %27 = arith.select %20, %21, %26 : vector<8x128xi1>, vector<8x128xf32>
    %28 = vector.extract_strided_slice %27 {offsets = [0, 0], sizes = [8, 32], strides = [1, 1]} : vector<8x128xf32> to vector<8x32xf32>
    %29 = vector.extract_strided_slice %27 {offsets = [0, 32], sizes = [8, 32], strides = [1, 1]} : vector<8x128xf32> to vector<8x32xf32>
    %30 = vector.extract_strided_slice %27 {offsets = [0, 64], sizes = [8, 32], strides = [1, 1]} : vector<8x128xf32> to vector<8x32xf32>
    %31 = vector.extract_strided_slice %27 {offsets = [0, 96], sizes = [8, 32], strides = [1, 1]} : vector<8x128xf32> to vector<8x32xf32>
    %32 = arith.mulf %29, %7 : vector<8x32xf32>
    %33 = arith.mulf %28, %30 : vector<8x32xf32>
    %34 = arith.addf %32, %33 : vector<8x32xf32>
    %35 = math.tanh %34 : vector<8x32xf32>
    %36 = arith.mulf %31, %35 : vector<8x32xf32>
    %37 = tpu.concatenate %36, %8 in 1 : vector<8x32xf32>, vector<8x64xf32> -> vector<8x96xf32>
    %cst_18 = arith.constant dense<0.000000e+00> : vector<8x256xf32>
    %38 = tpu.matmul %37, %4, %cst_18 {dimension_numbers = #tpu.dot_dimension_numbers<[1], [0], [0], [1], [0, 0, 1, 1], [], []>} : vector<8x96xf32>, vector<96x256xf32>, vector<8x256xf32> -> vector<8x256xf32>
    %39 = vector.broadcast %5 : vector<1x256xf32> to vector<8x256xf32>
    %40 = arith.addf %38, %39 : vector<8x256xf32>
    %41 = tpu.iota {dimensions = array<i32: 1>} : vector<8x256xi32>
    %c128_i32 = arith.constant 128 : i32
    %42 = vector.broadcast %c128_i32 : i32 to vector<8x256xi32>
    %43 = arith.cmpi sge, %41, %42 : vector<8x256xi32>
    %c192_i32 = arith.constant 192 : i32
    %44 = vector.broadcast %c192_i32 : i32 to vector<8x256xi32>
    %45 = arith.cmpi slt, %41, %44 : vector<8x256xi32>
    %46 = arith.andi %43, %45 : vector<8x256xi1>
    %47 = math.tanh %40 : vector<8x256xf32>
    %48 = arith.negf %40 : vector<8x256xf32>
    %49 = math.exp %48 : vector<8x256xf32>
    %cst_19 = arith.constant 1.000000e+00 : f32
    %50 = vector.broadcast %cst_19 : f32 to vector<8x256xf32>
    %51 = arith.addf %50, %49 : vector<8x256xf32>
    %52 = arith.divf %50, %51 : vector<8x256xf32>
    %53 = arith.select %46, %47, %52 : vector<8x256xi1>, vector<8x256xf32>
    %54 = vector.extract_strided_slice %53 {offsets = [0, 0], sizes = [8, 64], strides = [1, 1]} : vector<8x256xf32> to vector<8x64xf32>
    %55 = vector.extract_strided_slice %53 {offsets = [0, 64], sizes = [8, 64], strides = [1, 1]} : vector<8x256xf32> to vector<8x64xf32>
    %56 = vector.extract_strided_slice %53 {offsets = [0, 128], sizes = [8, 64], strides = [1, 1]} : vector<8x256xf32> to vector<8x64xf32>
    %57 = vector.extract_strided_slice %53 {offsets = [0, 192], sizes = [8, 64], strides = [1, 1]} : vector<8x256xf32> to vector<8x64xf32>
    %58 = arith.mulf %55, %9 : vector<8x64xf32>
    %59 = arith.mulf %54, %56 : vector<8x64xf32>
    %60 = arith.addf %58, %59 : vector<8x64xf32>
    %61 = math.tanh %60 : vector<8x64xf32>
    %62 = arith.mulf %57, %61 : vector<8x64xf32>
    %63 = arith.index_cast %c0_i32_14 : i32 to index
    %c0_20 = arith.constant 0 : index
    %c0_21 = arith.constant 0 : index
    %64 = vector.load %arg11[%63, %c0_20, %c0_21] : memref<8x8x64xf32, #tpu.memory_space<vmem>>, vector<1x8x64xf32>
    %65 = vector.shape_cast %64 : vector<1x8x64xf32> to vector<8x64xf32>
    %66 = vector.shape_cast %62 : vector<8x64xf32> to vector<1x8x64xf32>
    tpu.vector_store %arg11[%63, %c0_20, %c0_21], %66 {strides = array<i32>} : memref<8x8x64xf32, #tpu.memory_space<vmem>>, vector<1x8x64xf32>,
    %c1_i32 = arith.constant 1 : i32
    %67 = arith.index_cast %c1_i32 : i32 to index
    %c0_22 = arith.constant 0 : index
    %c0_23 = arith.constant 0 : index
    %68 = vector.load %arg2[%67, %c0_22, %c0_23] : memref<8x8x128xf32, #tpu.memory_space<vmem>>, vector<1x8x128xf32>
    %69 = vector.shape_cast %68 : vector<1x8x128xf32> to vector<8x128xf32>
    %cst_24 = arith.constant dense<0.000000e+00> : vector<8x128xf32>
    %70 = tpu.matmul %36, %3, %cst_24 {dimension_numbers = #tpu.dot_dimension_numbers<[1], [0], [0], [1], [0, 0, 1, 1], [], []>} : vector<8x32xf32>, vector<32x128xf32>, vector<8x128xf32> -> vector<8x128xf32>
    %71 = arith.addf %69, %70 : vector<8x128xf32>
    %72 = tpu.iota {dimensions = array<i32: 1>} : vector<8x128xi32>
    %c64_i32_25 = arith.constant 64 : i32
    %73 = vector.broadcast %c64_i32_25 : i32 to vector<8x128xi32>
    %74 = arith.cmpi sge, %72, %73 : vector<8x128xi32>
    %c96_i32_26 = arith.constant 96 : i32
    %75 = vector.broadcast %c96_i32_26 : i32 to vector<8x128xi32>
    %76 = arith.cmpi slt, %72, %75 : vector<8x128xi32>
    %77 = arith.andi %74, %76 : vector<8x128xi1>
    %78 = math.tanh %71 : vector<8x128xf32>
    %79 = arith.negf %71 : vector<8x128xf32>
    %80 = math.exp %79 : vector<8x128xf32>
    %cst_27 = arith.constant 1.000000e+00 : f32
    %81 = vector.broadcast %cst_27 : f32 to vector<8x128xf32>
    %82 = arith.addf %81, %80 : vector<8x128xf32>
    %83 = arith.divf %81, %82 : vector<8x128xf32>
    %84 = arith.select %77, %78, %83 : vector<8x128xi1>, vector<8x128xf32>
    %85 = vector.extract_strided_slice %84 {offsets = [0, 0], sizes = [8, 32], strides = [1, 1]} : vector<8x128xf32> to vector<8x32xf32>
    %86 = vector.extract_strided_slice %84 {offsets = [0, 32], sizes = [8, 32], strides = [1, 1]} : vector<8x128xf32> to vector<8x32xf32>
    %87 = vector.extract_strided_slice %84 {offsets = [0, 64], sizes = [8, 32], strides = [1, 1]} : vector<8x128xf32> to vector<8x32xf32>
    %88 = vector.extract_strided_slice %84 {offsets = [0, 96], sizes = [8, 32], strides = [1, 1]} : vector<8x128xf32> to vector<8x32xf32>
    %89 = arith.mulf %86, %34 : vector<8x32xf32>
    %90 = arith.mulf %85, %87 : vector<8x32xf32>
    %91 = arith.addf %89, %90 : vector<8x32xf32>
    %92 = math.tanh %91 : vector<8x32xf32>
    %93 = arith.mulf %88, %92 : vector<8x32xf32>
    %94 = tpu.concatenate %93, %62 in 1 : vector<8x32xf32>, vector<8x64xf32> -> vector<8x96xf32>
    %cst_28 = arith.constant dense<0.000000e+00> : vector<8x256xf32>
    %95 = tpu.matmul %94, %4, %cst_28 {dimension_numbers = #tpu.dot_dimension_numbers<[1], [0], [0], [1], [0, 0, 1, 1], [], []>} : vector<8x96xf32>, vector<96x256xf32>, vector<8x256xf32> -> vector<8x256xf32>
    %96 = vector.broadcast %5 : vector<1x256xf32> to vector<8x256xf32>
    %97 = arith.addf %95, %96 : vector<8x256xf32>
    %98 = tpu.iota {dimensions = array<i32: 1>} : vector<8x256xi32>
    %c128_i32_29 = arith.constant 128 : i32
    %99 = vector.broadcast %c128_i32_29 : i32 to vector<8x256xi32>
    %100 = arith.cmpi sge, %98, %99 : vector<8x256xi32>
    %c192_i32_30 = arith.constant 192 : i32
    %101 = vector.broadcast %c192_i32_30 : i32 to vector<8x256xi32>
    %102 = arith.cmpi slt, %98, %101 : vector<8x256xi32>
    %103 = arith.andi %100, %102 : vector<8x256xi1>
    %104 = math.tanh %97 : vector<8x256xf32>
    %105 = arith.negf %97 : vector<8x256xf32>
    %106 = math.exp %105 : vector<8x256xf32>
    %cst_31 = arith.constant 1.000000e+00 : f32
    %107 = vector.broadcast %cst_31 : f32 to vector<8x256xf32>
    %108 = arith.addf %107, %106 : vector<8x256xf32>
    %109 = arith.divf %107, %108 : vector<8x256xf32>
    %110 = arith.select %103, %104, %109 : vector<8x256xi1>, vector<8x256xf32>
    %111 = vector.extract_strided_slice %110 {offsets = [0, 0], sizes = [8, 64], strides = [1, 1]} : vector<8x256xf32> to vector<8x64xf32>
    %112 = vector.extract_strided_slice %110 {offsets = [0, 64], sizes = [8, 64], strides = [1, 1]} : vector<8x256xf32> to vector<8x64xf32>
    %113 = vector.extract_strided_slice %110 {offsets = [0, 128], sizes = [8, 64], strides = [1, 1]} : vector<8x256xf32> to vector<8x64xf32>
    %114 = vector.extract_strided_slice %110 {offsets = [0, 192], sizes = [8, 64], strides = [1, 1]} : vector<8x256xf32> to vector<8x64xf32>
    %115 = arith.mulf %112, %60 : vector<8x64xf32>
    %116 = arith.mulf %111, %113 : vector<8x64xf32>
    %117 = arith.addf %115, %116 : vector<8x64xf32>
    %118 = math.tanh %117 : vector<8x64xf32>
    %119 = arith.mulf %114, %118 : vector<8x64xf32>
    %120 = arith.index_cast %c1_i32 : i32 to index
    %c0_32 = arith.constant 0 : index
    %c0_33 = arith.constant 0 : index
    %121 = vector.load %arg11[%120, %c0_32, %c0_33] : memref<8x8x64xf32, #tpu.memory_space<vmem>>, vector<1x8x64xf32>
    %122 = vector.shape_cast %121 : vector<1x8x64xf32> to vector<8x64xf32>
    %123 = vector.shape_cast %119 : vector<8x64xf32> to vector<1x8x64xf32>
    tpu.vector_store %arg11[%120, %c0_32, %c0_33], %123 {strides = array<i32>} : memref<8x8x64xf32, #tpu.memory_space<vmem>>, vector<1x8x64xf32>,
    %c2_i32 = arith.constant 2 : i32
    %124 = arith.index_cast %c2_i32 : i32 to index
    %c0_34 = arith.constant 0 : index
    %c0_35 = arith.constant 0 : index
    %125 = vector.load %arg2[%124, %c0_34, %c0_35] : memref<8x8x128xf32, #tpu.memory_space<vmem>>, vector<1x8x128xf32>
    %126 = vector.shape_cast %125 : vector<1x8x128xf32> to vector<8x128xf32>
    %cst_36 = arith.constant dense<0.000000e+00> : vector<8x128xf32>
    %127 = tpu.matmul %93, %3, %cst_36 {dimension_numbers = #tpu.dot_dimension_numbers<[1], [0], [0], [1], [0, 0, 1, 1], [], []>} : vector<8x32xf32>, vector<32x128xf32>, vector<8x128xf32> -> vector<8x128xf32>
    %128 = arith.addf %126, %127 : vector<8x128xf32>
    %129 = tpu.iota {dimensions = array<i32: 1>} : vector<8x128xi32>
    %c64_i32_37 = arith.constant 64 : i32
    %130 = vector.broadcast %c64_i32_37 : i32 to vector<8x128xi32>
    %131 = arith.cmpi sge, %129, %130 : vector<8x128xi32>
    %c96_i32_38 = arith.constant 96 : i32
    %132 = vector.broadcast %c96_i32_38 : i32 to vector<8x128xi32>
    %133 = arith.cmpi slt, %129, %132 : vector<8x128xi32>
    %134 = arith.andi %131, %133 : vector<8x128xi1>
    %135 = math.tanh %128 : vector<8x128xf32>
    %136 = arith.negf %128 : vector<8x128xf32>
    %137 = math.exp %136 : vector<8x128xf32>
    %cst_39 = arith.constant 1.000000e+00 : f32
    %138 = vector.broadcast %cst_39 : f32 to vector<8x128xf32>
    %139 = arith.addf %138, %137 : vector<8x128xf32>
    %140 = arith.divf %138, %139 : vector<8x128xf32>
    %141 = arith.select %134, %135, %140 : vector<8x128xi1>, vector<8x128xf32>
    %142 = vector.extract_strided_slice %141 {offsets = [0, 0], sizes = [8, 32], strides = [1, 1]} : vector<8x128xf32> to vector<8x32xf32>
    %143 = vector.extract_strided_slice %141 {offsets = [0, 32], sizes = [8, 32], strides = [1, 1]} : vector<8x128xf32> to vector<8x32xf32>
    %144 = vector.extract_strided_slice %141 {offsets = [0, 64], sizes = [8, 32], strides = [1, 1]} : vector<8x128xf32> to vector<8x32xf32>
    %145 = vector.extract_strided_slice %141 {offsets = [0, 96], sizes = [8, 32], strides = [1, 1]} : vector<8x128xf32> to vector<8x32xf32>
    %146 = arith.mulf %143, %91 : vector<8x32xf32>
    %147 = arith.mulf %142, %144 : vector<8x32xf32>
    %148 = arith.addf %146, %147 : vector<8x32xf32>
    %149 = math.tanh %148 : vector<8x32xf32>
    %150 = arith.mulf %145, %149 : vector<8x32xf32>
    %151 = tpu.concatenate %150, %119 in 1 : vector<8x32xf32>, vector<8x64xf32> -> vector<8x96xf32>
    %cst_40 = arith.constant dense<0.000000e+00> : vector<8x256xf32>
    %152 = tpu.matmul %151, %4, %cst_40 {dimension_numbers = #tpu.dot_dimension_numbers<[1], [0], [0], [1], [0, 0, 1, 1], [], []>} : vector<8x96xf32>, vector<96x256xf32>, vector<8x256xf32> -> vector<8x256xf32>
    %153 = vector.broadcast %5 : vector<1x256xf32> to vector<8x256xf32>
    %154 = arith.addf %152, %153 : vector<8x256xf32>
    %155 = tpu.iota {dimensions = array<i32: 1>} : vector<8x256xi32>
    %c128_i32_41 = arith.constant 128 : i32
    %156 = vector.broadcast %c128_i32_41 : i32 to vector<8x256xi32>
    %157 = arith.cmpi sge, %155, %156 : vector<8x256xi32>
    %c192_i32_42 = arith.constant 192 : i32
    %158 = vector.broadcast %c192_i32_42 : i32 to vector<8x256xi32>
    %159 = arith.cmpi slt, %155, %158 : vector<8x256xi32>
    %160 = arith.andi %157, %159 : vector<8x256xi1>
    %161 = math.tanh %154 : vector<8x256xf32>
    %162 = arith.negf %154 : vector<8x256xf32>
    %163 = math.exp %162 : vector<8x256xf32>
    %cst_43 = arith.constant 1.000000e+00 : f32
    %164 = vector.broadcast %cst_43 : f32 to vector<8x256xf32>
    %165 = arith.addf %164, %163 : vector<8x256xf32>
    %166 = arith.divf %164, %165 : vector<8x256xf32>
    %167 = arith.select %160, %161, %166 : vector<8x256xi1>, vector<8x256xf32>
    %168 = vector.extract_strided_slice %167 {offsets = [0, 0], sizes = [8, 64], strides = [1, 1]} : vector<8x256xf32> to vector<8x64xf32>
    %169 = vector.extract_strided_slice %167 {offsets = [0, 64], sizes = [8, 64], strides = [1, 1]} : vector<8x256xf32> to vector<8x64xf32>
    %170 = vector.extract_strided_slice %167 {offsets = [0, 128], sizes = [8, 64], strides = [1, 1]} : vector<8x256xf32> to vector<8x64xf32>
    %171 = vector.extract_strided_slice %167 {offsets = [0, 192], sizes = [8, 64], strides = [1, 1]} : vector<8x256xf32> to vector<8x64xf32>
    %172 = arith.mulf %169, %117 : vector<8x64xf32>
    %173 = arith.mulf %168, %170 : vector<8x64xf32>
    %174 = arith.addf %172, %173 : vector<8x64xf32>
    %175 = math.tanh %174 : vector<8x64xf32>
    %176 = arith.mulf %171, %175 : vector<8x64xf32>
    %177 = arith.index_cast %c2_i32 : i32 to index
    %c0_44 = arith.constant 0 : index
    %c0_45 = arith.constant 0 : index
    %178 = vector.load %arg11[%177, %c0_44, %c0_45] : memref<8x8x64xf32, #tpu.memory_space<vmem>>, vector<1x8x64xf32>
    %179 = vector.shape_cast %178 : vector<1x8x64xf32> to vector<8x64xf32>
    %180 = vector.shape_cast %176 : vector<8x64xf32> to vector<1x8x64xf32>
    tpu.vector_store %arg11[%177, %c0_44, %c0_45], %180 {strides = array<i32>} : memref<8x8x64xf32, #tpu.memory_space<vmem>>, vector<1x8x64xf32>,
    %c3_i32 = arith.constant 3 : i32
    %181 = arith.index_cast %c3_i32 : i32 to index
    %c0_46 = arith.constant 0 : index
    %c0_47 = arith.constant 0 : index
    %182 = vector.load %arg2[%181, %c0_46, %c0_47] : memref<8x8x128xf32, #tpu.memory_space<vmem>>, vector<1x8x128xf32>
    %183 = vector.shape_cast %182 : vector<1x8x128xf32> to vector<8x128xf32>
    %cst_48 = arith.constant dense<0.000000e+00> : vector<8x128xf32>
    %184 = tpu.matmul %150, %3, %cst_48 {dimension_numbers = #tpu.dot_dimension_numbers<[1], [0], [0], [1], [0, 0, 1, 1], [], []>} : vector<8x32xf32>, vector<32x128xf32>, vector<8x128xf32> -> vector<8x128xf32>
    %185 = arith.addf %183, %184 : vector<8x128xf32>
    %186 = tpu.iota {dimensions = array<i32: 1>} : vector<8x128xi32>
    %c64_i32_49 = arith.constant 64 : i32
    %187 = vector.broadcast %c64_i32_49 : i32 to vector<8x128xi32>
    %188 = arith.cmpi sge, %186, %187 : vector<8x128xi32>
    %c96_i32_50 = arith.constant 96 : i32
    %189 = vector.broadcast %c96_i32_50 : i32 to vector<8x128xi32>
    %190 = arith.cmpi slt, %186, %189 : vector<8x128xi32>
    %191 = arith.andi %188, %190 : vector<8x128xi1>
    %192 = math.tanh %185 : vector<8x128xf32>
    %193 = arith.negf %185 : vector<8x128xf32>
    %194 = math.exp %193 : vector<8x128xf32>
    %cst_51 = arith.constant 1.000000e+00 : f32
    %195 = vector.broadcast %cst_51 : f32 to vector<8x128xf32>
    %196 = arith.addf %195, %194 : vector<8x128xf32>
    %197 = arith.divf %195, %196 : vector<8x128xf32>
    %198 = arith.select %191, %192, %197 : vector<8x128xi1>, vector<8x128xf32>
    %199 = vector.extract_strided_slice %198 {offsets = [0, 0], sizes = [8, 32], strides = [1, 1]} : vector<8x128xf32> to vector<8x32xf32>
    %200 = vector.extract_strided_slice %198 {offsets = [0, 32], sizes = [8, 32], strides = [1, 1]} : vector<8x128xf32> to vector<8x32xf32>
    %201 = vector.extract_strided_slice %198 {offsets = [0, 64], sizes = [8, 32], strides = [1, 1]} : vector<8x128xf32> to vector<8x32xf32>
    %202 = vector.extract_strided_slice %198 {offsets = [0, 96], sizes = [8, 32], strides = [1, 1]} : vector<8x128xf32> to vector<8x32xf32>
    %203 = arith.mulf %200, %148 : vector<8x32xf32>
    %204 = arith.mulf %199, %201 : vector<8x32xf32>
    %205 = arith.addf %203, %204 : vector<8x32xf32>
    %206 = math.tanh %205 : vector<8x32xf32>
    %207 = arith.mulf %202, %206 : vector<8x32xf32>
    %208 = tpu.concatenate %207, %176 in 1 : vector<8x32xf32>, vector<8x64xf32> -> vector<8x96xf32>
    %cst_52 = arith.constant dense<0.000000e+00> : vector<8x256xf32>
    %209 = tpu.matmul %208, %4, %cst_52 {dimension_numbers = #tpu.dot_dimension_numbers<[1], [0], [0], [1], [0, 0, 1, 1], [], []>} : vector<8x96xf32>, vector<96x256xf32>, vector<8x256xf32> -> vector<8x256xf32>
    %210 = vector.broadcast %5 : vector<1x256xf32> to vector<8x256xf32>
    %211 = arith.addf %209, %210 : vector<8x256xf32>
    %212 = tpu.iota {dimensions = array<i32: 1>} : vector<8x256xi32>
    %c128_i32_53 = arith.constant 128 : i32
    %213 = vector.broadcast %c128_i32_53 : i32 to vector<8x256xi32>
    %214 = arith.cmpi sge, %212, %213 : vector<8x256xi32>
    %c192_i32_54 = arith.constant 192 : i32
    %215 = vector.broadcast %c192_i32_54 : i32 to vector<8x256xi32>
    %216 = arith.cmpi slt, %212, %215 : vector<8x256xi32>
    %217 = arith.andi %214, %216 : vector<8x256xi1>
    %218 = math.tanh %211 : vector<8x256xf32>
    %219 = arith.negf %211 : vector<8x256xf32>
    %220 = math.exp %219 : vector<8x256xf32>
    %cst_55 = arith.constant 1.000000e+00 : f32
    %221 = vector.broadcast %cst_55 : f32 to vector<8x256xf32>
    %222 = arith.addf %221, %220 : vector<8x256xf32>
    %223 = arith.divf %221, %222 : vector<8x256xf32>
    %224 = arith.select %217, %218, %223 : vector<8x256xi1>, vector<8x256xf32>
    %225 = vector.extract_strided_slice %224 {offsets = [0, 0], sizes = [8, 64], strides = [1, 1]} : vector<8x256xf32> to vector<8x64xf32>
    %226 = vector.extract_strided_slice %224 {offsets = [0, 64], sizes = [8, 64], strides = [1, 1]} : vector<8x256xf32> to vector<8x64xf32>
    %227 = vector.extract_strided_slice %224 {offsets = [0, 128], sizes = [8, 64], strides = [1, 1]} : vector<8x256xf32> to vector<8x64xf32>
    %228 = vector.extract_strided_slice %224 {offsets = [0, 192], sizes = [8, 64], strides = [1, 1]} : vector<8x256xf32> to vector<8x64xf32>
    %229 = arith.mulf %226, %174 : vector<8x64xf32>
    %230 = arith.mulf %225, %227 : vector<8x64xf32>
    %231 = arith.addf %229, %230 : vector<8x64xf32>
    %232 = math.tanh %231 : vector<8x64xf32>
    %233 = arith.mulf %228, %232 : vector<8x64xf32>
    %234 = arith.index_cast %c3_i32 : i32 to index
    %c0_56 = arith.constant 0 : index
    %c0_57 = arith.constant 0 : index
    %235 = vector.load %arg11[%234, %c0_56, %c0_57] : memref<8x8x64xf32, #tpu.memory_space<vmem>>, vector<1x8x64xf32>
    %236 = vector.shape_cast %235 : vector<1x8x64xf32> to vector<8x64xf32>
    %237 = vector.shape_cast %233 : vector<8x64xf32> to vector<1x8x64xf32>
    tpu.vector_store %arg11[%234, %c0_56, %c0_57], %237 {strides = array<i32>} : memref<8x8x64xf32, #tpu.memory_space<vmem>>, vector<1x8x64xf32>,
    %c4_i32 = arith.constant 4 : i32
    %238 = arith.index_cast %c4_i32 : i32 to index
    %c0_58 = arith.constant 0 : index
    %c0_59 = arith.constant 0 : index
    %239 = vector.load %arg2[%238, %c0_58, %c0_59] : memref<8x8x128xf32, #tpu.memory_space<vmem>>, vector<1x8x128xf32>
    %240 = vector.shape_cast %239 : vector<1x8x128xf32> to vector<8x128xf32>
    %cst_60 = arith.constant dense<0.000000e+00> : vector<8x128xf32>
    %241 = tpu.matmul %207, %3, %cst_60 {dimension_numbers = #tpu.dot_dimension_numbers<[1], [0], [0], [1], [0, 0, 1, 1], [], []>} : vector<8x32xf32>, vector<32x128xf32>, vector<8x128xf32> -> vector<8x128xf32>
    %242 = arith.addf %240, %241 : vector<8x128xf32>
    %243 = tpu.iota {dimensions = array<i32: 1>} : vector<8x128xi32>
    %c64_i32_61 = arith.constant 64 : i32
    %244 = vector.broadcast %c64_i32_61 : i32 to vector<8x128xi32>
    %245 = arith.cmpi sge, %243, %244 : vector<8x128xi32>
    %c96_i32_62 = arith.constant 96 : i32
    %246 = vector.broadcast %c96_i32_62 : i32 to vector<8x128xi32>
    %247 = arith.cmpi slt, %243, %246 : vector<8x128xi32>
    %248 = arith.andi %245, %247 : vector<8x128xi1>
    %249 = math.tanh %242 : vector<8x128xf32>
    %250 = arith.negf %242 : vector<8x128xf32>
    %251 = math.exp %250 : vector<8x128xf32>
    %cst_63 = arith.constant 1.000000e+00 : f32
    %252 = vector.broadcast %cst_63 : f32 to vector<8x128xf32>
    %253 = arith.addf %252, %251 : vector<8x128xf32>
    %254 = arith.divf %252, %253 : vector<8x128xf32>
    %255 = arith.select %248, %249, %254 : vector<8x128xi1>, vector<8x128xf32>
    %256 = vector.extract_strided_slice %255 {offsets = [0, 0], sizes = [8, 32], strides = [1, 1]} : vector<8x128xf32> to vector<8x32xf32>
    %257 = vector.extract_strided_slice %255 {offsets = [0, 32], sizes = [8, 32], strides = [1, 1]} : vector<8x128xf32> to vector<8x32xf32>
    %258 = vector.extract_strided_slice %255 {offsets = [0, 64], sizes = [8, 32], strides = [1, 1]} : vector<8x128xf32> to vector<8x32xf32>
    %259 = vector.extract_strided_slice %255 {offsets = [0, 96], sizes = [8, 32], strides = [1, 1]} : vector<8x128xf32> to vector<8x32xf32>
    %260 = arith.mulf %257, %205 : vector<8x32xf32>
    %261 = arith.mulf %256, %258 : vector<8x32xf32>
    %262 = arith.addf %260, %261 : vector<8x32xf32>
    %263 = math.tanh %262 : vector<8x32xf32>
    %264 = arith.mulf %259, %263 : vector<8x32xf32>
    %265 = tpu.concatenate %264, %233 in 1 : vector<8x32xf32>, vector<8x64xf32> -> vector<8x96xf32>
    %cst_64 = arith.constant dense<0.000000e+00> : vector<8x256xf32>
    %266 = tpu.matmul %265, %4, %cst_64 {dimension_numbers = #tpu.dot_dimension_numbers<[1], [0], [0], [1], [0, 0, 1, 1], [], []>} : vector<8x96xf32>, vector<96x256xf32>, vector<8x256xf32> -> vector<8x256xf32>
    %267 = vector.broadcast %5 : vector<1x256xf32> to vector<8x256xf32>
    %268 = arith.addf %266, %267 : vector<8x256xf32>
    %269 = tpu.iota {dimensions = array<i32: 1>} : vector<8x256xi32>
    %c128_i32_65 = arith.constant 128 : i32
    %270 = vector.broadcast %c128_i32_65 : i32 to vector<8x256xi32>
    %271 = arith.cmpi sge, %269, %270 : vector<8x256xi32>
    %c192_i32_66 = arith.constant 192 : i32
    %272 = vector.broadcast %c192_i32_66 : i32 to vector<8x256xi32>
    %273 = arith.cmpi slt, %269, %272 : vector<8x256xi32>
    %274 = arith.andi %271, %273 : vector<8x256xi1>
    %275 = math.tanh %268 : vector<8x256xf32>
    %276 = arith.negf %268 : vector<8x256xf32>
    %277 = math.exp %276 : vector<8x256xf32>
    %cst_67 = arith.constant 1.000000e+00 : f32
    %278 = vector.broadcast %cst_67 : f32 to vector<8x256xf32>
    %279 = arith.addf %278, %277 : vector<8x256xf32>
    %280 = arith.divf %278, %279 : vector<8x256xf32>
    %281 = arith.select %274, %275, %280 : vector<8x256xi1>, vector<8x256xf32>
    %282 = vector.extract_strided_slice %281 {offsets = [0, 0], sizes = [8, 64], strides = [1, 1]} : vector<8x256xf32> to vector<8x64xf32>
    %283 = vector.extract_strided_slice %281 {offsets = [0, 64], sizes = [8, 64], strides = [1, 1]} : vector<8x256xf32> to vector<8x64xf32>
    %284 = vector.extract_strided_slice %281 {offsets = [0, 128], sizes = [8, 64], strides = [1, 1]} : vector<8x256xf32> to vector<8x64xf32>
    %285 = vector.extract_strided_slice %281 {offsets = [0, 192], sizes = [8, 64], strides = [1, 1]} : vector<8x256xf32> to vector<8x64xf32>
    %286 = arith.mulf %283, %231 : vector<8x64xf32>
    %287 = arith.mulf %282, %284 : vector<8x64xf32>
    %288 = arith.addf %286, %287 : vector<8x64xf32>
    %289 = math.tanh %288 : vector<8x64xf32>
    %290 = arith.mulf %285, %289 : vector<8x64xf32>
    %291 = arith.index_cast %c4_i32 : i32 to index
    %c0_68 = arith.constant 0 : index
    %c0_69 = arith.constant 0 : index
    %292 = vector.load %arg11[%291, %c0_68, %c0_69] : memref<8x8x64xf32, #tpu.memory_space<vmem>>, vector<1x8x64xf32>
    %293 = vector.shape_cast %292 : vector<1x8x64xf32> to vector<8x64xf32>
    %294 = vector.shape_cast %290 : vector<8x64xf32> to vector<1x8x64xf32>
    tpu.vector_store %arg11[%291, %c0_68, %c0_69], %294 {strides = array<i32>} : memref<8x8x64xf32, #tpu.memory_space<vmem>>, vector<1x8x64xf32>,
    %c5_i32 = arith.constant 5 : i32
    %295 = arith.index_cast %c5_i32 : i32 to index
    %c0_70 = arith.constant 0 : index
    %c0_71 = arith.constant 0 : index
    %296 = vector.load %arg2[%295, %c0_70, %c0_71] : memref<8x8x128xf32, #tpu.memory_space<vmem>>, vector<1x8x128xf32>
    %297 = vector.shape_cast %296 : vector<1x8x128xf32> to vector<8x128xf32>
    %cst_72 = arith.constant dense<0.000000e+00> : vector<8x128xf32>
    %298 = tpu.matmul %264, %3, %cst_72 {dimension_numbers = #tpu.dot_dimension_numbers<[1], [0], [0], [1], [0, 0, 1, 1], [], []>} : vector<8x32xf32>, vector<32x128xf32>, vector<8x128xf32> -> vector<8x128xf32>
    %299 = arith.addf %297, %298 : vector<8x128xf32>
    %300 = tpu.iota {dimensions = array<i32: 1>} : vector<8x128xi32>
    %c64_i32_73 = arith.constant 64 : i32
    %301 = vector.broadcast %c64_i32_73 : i32 to vector<8x128xi32>
    %302 = arith.cmpi sge, %300, %301 : vector<8x128xi32>
    %c96_i32_74 = arith.constant 96 : i32
    %303 = vector.broadcast %c96_i32_74 : i32 to vector<8x128xi32>
    %304 = arith.cmpi slt, %300, %303 : vector<8x128xi32>
    %305 = arith.andi %302, %304 : vector<8x128xi1>
    %306 = math.tanh %299 : vector<8x128xf32>
    %307 = arith.negf %299 : vector<8x128xf32>
    %308 = math.exp %307 : vector<8x128xf32>
    %cst_75 = arith.constant 1.000000e+00 : f32
    %309 = vector.broadcast %cst_75 : f32 to vector<8x128xf32>
    %310 = arith.addf %309, %308 : vector<8x128xf32>
    %311 = arith.divf %309, %310 : vector<8x128xf32>
    %312 = arith.select %305, %306, %311 : vector<8x128xi1>, vector<8x128xf32>
    %313 = vector.extract_strided_slice %312 {offsets = [0, 0], sizes = [8, 32], strides = [1, 1]} : vector<8x128xf32> to vector<8x32xf32>
    %314 = vector.extract_strided_slice %312 {offsets = [0, 32], sizes = [8, 32], strides = [1, 1]} : vector<8x128xf32> to vector<8x32xf32>
    %315 = vector.extract_strided_slice %312 {offsets = [0, 64], sizes = [8, 32], strides = [1, 1]} : vector<8x128xf32> to vector<8x32xf32>
    %316 = vector.extract_strided_slice %312 {offsets = [0, 96], sizes = [8, 32], strides = [1, 1]} : vector<8x128xf32> to vector<8x32xf32>
    %317 = arith.mulf %314, %262 : vector<8x32xf32>
    %318 = arith.mulf %313, %315 : vector<8x32xf32>
    %319 = arith.addf %317, %318 : vector<8x32xf32>
    %320 = math.tanh %319 : vector<8x32xf32>
    %321 = arith.mulf %316, %320 : vector<8x32xf32>
    %322 = tpu.concatenate %321, %290 in 1 : vector<8x32xf32>, vector<8x64xf32> -> vector<8x96xf32>
    %cst_76 = arith.constant dense<0.000000e+00> : vector<8x256xf32>
    %323 = tpu.matmul %322, %4, %cst_76 {dimension_numbers = #tpu.dot_dimension_numbers<[1], [0], [0], [1], [0, 0, 1, 1], [], []>} : vector<8x96xf32>, vector<96x256xf32>, vector<8x256xf32> -> vector<8x256xf32>
    %324 = vector.broadcast %5 : vector<1x256xf32> to vector<8x256xf32>
    %325 = arith.addf %323, %324 : vector<8x256xf32>
    %326 = tpu.iota {dimensions = array<i32: 1>} : vector<8x256xi32>
    %c128_i32_77 = arith.constant 128 : i32
    %327 = vector.broadcast %c128_i32_77 : i32 to vector<8x256xi32>
    %328 = arith.cmpi sge, %326, %327 : vector<8x256xi32>
    %c192_i32_78 = arith.constant 192 : i32
    %329 = vector.broadcast %c192_i32_78 : i32 to vector<8x256xi32>
    %330 = arith.cmpi slt, %326, %329 : vector<8x256xi32>
    %331 = arith.andi %328, %330 : vector<8x256xi1>
    %332 = math.tanh %325 : vector<8x256xf32>
    %333 = arith.negf %325 : vector<8x256xf32>
    %334 = math.exp %333 : vector<8x256xf32>
    %cst_79 = arith.constant 1.000000e+00 : f32
    %335 = vector.broadcast %cst_79 : f32 to vector<8x256xf32>
    %336 = arith.addf %335, %334 : vector<8x256xf32>
    %337 = arith.divf %335, %336 : vector<8x256xf32>
    %338 = arith.select %331, %332, %337 : vector<8x256xi1>, vector<8x256xf32>
    %339 = vector.extract_strided_slice %338 {offsets = [0, 0], sizes = [8, 64], strides = [1, 1]} : vector<8x256xf32> to vector<8x64xf32>
    %340 = vector.extract_strided_slice %338 {offsets = [0, 64], sizes = [8, 64], strides = [1, 1]} : vector<8x256xf32> to vector<8x64xf32>
    %341 = vector.extract_strided_slice %338 {offsets = [0, 128], sizes = [8, 64], strides = [1, 1]} : vector<8x256xf32> to vector<8x64xf32>
    %342 = vector.extract_strided_slice %338 {offsets = [0, 192], sizes = [8, 64], strides = [1, 1]} : vector<8x256xf32> to vector<8x64xf32>
    %343 = arith.mulf %340, %288 : vector<8x64xf32>
    %344 = arith.mulf %339, %341 : vector<8x64xf32>
    %345 = arith.addf %343, %344 : vector<8x64xf32>
    %346 = math.tanh %345 : vector<8x64xf32>
    %347 = arith.mulf %342, %346 : vector<8x64xf32>
    %348 = arith.index_cast %c5_i32 : i32 to index
    %c0_80 = arith.constant 0 : index
    %c0_81 = arith.constant 0 : index
    %349 = vector.load %arg11[%348, %c0_80, %c0_81] : memref<8x8x64xf32, #tpu.memory_space<vmem>>, vector<1x8x64xf32>
    %350 = vector.shape_cast %349 : vector<1x8x64xf32> to vector<8x64xf32>
    %351 = vector.shape_cast %347 : vector<8x64xf32> to vector<1x8x64xf32>
    tpu.vector_store %arg11[%348, %c0_80, %c0_81], %351 {strides = array<i32>} : memref<8x8x64xf32, #tpu.memory_space<vmem>>, vector<1x8x64xf32>,
    %c6_i32 = arith.constant 6 : i32
    %352 = arith.index_cast %c6_i32 : i32 to index
    %c0_82 = arith.constant 0 : index
    %c0_83 = arith.constant 0 : index
    %353 = vector.load %arg2[%352, %c0_82, %c0_83] : memref<8x8x128xf32, #tpu.memory_space<vmem>>, vector<1x8x128xf32>
    %354 = vector.shape_cast %353 : vector<1x8x128xf32> to vector<8x128xf32>
    %cst_84 = arith.constant dense<0.000000e+00> : vector<8x128xf32>
    %355 = tpu.matmul %321, %3, %cst_84 {dimension_numbers = #tpu.dot_dimension_numbers<[1], [0], [0], [1], [0, 0, 1, 1], [], []>} : vector<8x32xf32>, vector<32x128xf32>, vector<8x128xf32> -> vector<8x128xf32>
    %356 = arith.addf %354, %355 : vector<8x128xf32>
    %357 = tpu.iota {dimensions = array<i32: 1>} : vector<8x128xi32>
    %c64_i32_85 = arith.constant 64 : i32
    %358 = vector.broadcast %c64_i32_85 : i32 to vector<8x128xi32>
    %359 = arith.cmpi sge, %357, %358 : vector<8x128xi32>
    %c96_i32_86 = arith.constant 96 : i32
    %360 = vector.broadcast %c96_i32_86 : i32 to vector<8x128xi32>
    %361 = arith.cmpi slt, %357, %360 : vector<8x128xi32>
    %362 = arith.andi %359, %361 : vector<8x128xi1>
    %363 = math.tanh %356 : vector<8x128xf32>
    %364 = arith.negf %356 : vector<8x128xf32>
    %365 = math.exp %364 : vector<8x128xf32>
    %cst_87 = arith.constant 1.000000e+00 : f32
    %366 = vector.broadcast %cst_87 : f32 to vector<8x128xf32>
    %367 = arith.addf %366, %365 : vector<8x128xf32>
    %368 = arith.divf %366, %367 : vector<8x128xf32>
    %369 = arith.select %362, %363, %368 : vector<8x128xi1>, vector<8x128xf32>
    %370 = vector.extract_strided_slice %369 {offsets = [0, 0], sizes = [8, 32], strides = [1, 1]} : vector<8x128xf32> to vector<8x32xf32>
    %371 = vector.extract_strided_slice %369 {offsets = [0, 32], sizes = [8, 32], strides = [1, 1]} : vector<8x128xf32> to vector<8x32xf32>
    %372 = vector.extract_strided_slice %369 {offsets = [0, 64], sizes = [8, 32], strides = [1, 1]} : vector<8x128xf32> to vector<8x32xf32>
    %373 = vector.extract_strided_slice %369 {offsets = [0, 96], sizes = [8, 32], strides = [1, 1]} : vector<8x128xf32> to vector<8x32xf32>
    %374 = arith.mulf %371, %319 : vector<8x32xf32>
    %375 = arith.mulf %370, %372 : vector<8x32xf32>
    %376 = arith.addf %374, %375 : vector<8x32xf32>
    %377 = math.tanh %376 : vector<8x32xf32>
    %378 = arith.mulf %373, %377 : vector<8x32xf32>
    %379 = tpu.concatenate %378, %347 in 1 : vector<8x32xf32>, vector<8x64xf32> -> vector<8x96xf32>
    %cst_88 = arith.constant dense<0.000000e+00> : vector<8x256xf32>
    %380 = tpu.matmul %379, %4, %cst_88 {dimension_numbers = #tpu.dot_dimension_numbers<[1], [0], [0], [1], [0, 0, 1, 1], [], []>} : vector<8x96xf32>, vector<96x256xf32>, vector<8x256xf32> -> vector<8x256xf32>
    %381 = vector.broadcast %5 : vector<1x256xf32> to vector<8x256xf32>
    %382 = arith.addf %380, %381 : vector<8x256xf32>
    %383 = tpu.iota {dimensions = array<i32: 1>} : vector<8x256xi32>
    %c128_i32_89 = arith.constant 128 : i32
    %384 = vector.broadcast %c128_i32_89 : i32 to vector<8x256xi32>
    %385 = arith.cmpi sge, %383, %384 : vector<8x256xi32>
    %c192_i32_90 = arith.constant 192 : i32
    %386 = vector.broadcast %c192_i32_90 : i32 to vector<8x256xi32>
    %387 = arith.cmpi slt, %383, %386 : vector<8x256xi32>
    %388 = arith.andi %385, %387 : vector<8x256xi1>
    %389 = math.tanh %382 : vector<8x256xf32>
    %390 = arith.negf %382 : vector<8x256xf32>
    %391 = math.exp %390 : vector<8x256xf32>
    %cst_91 = arith.constant 1.000000e+00 : f32
    %392 = vector.broadcast %cst_91 : f32 to vector<8x256xf32>
    %393 = arith.addf %392, %391 : vector<8x256xf32>
    %394 = arith.divf %392, %393 : vector<8x256xf32>
    %395 = arith.select %388, %389, %394 : vector<8x256xi1>, vector<8x256xf32>
    %396 = vector.extract_strided_slice %395 {offsets = [0, 0], sizes = [8, 64], strides = [1, 1]} : vector<8x256xf32> to vector<8x64xf32>
    %397 = vector.extract_strided_slice %395 {offsets = [0, 64], sizes = [8, 64], strides = [1, 1]} : vector<8x256xf32> to vector<8x64xf32>
    %398 = vector.extract_strided_slice %395 {offsets = [0, 128], sizes = [8, 64], strides = [1, 1]} : vector<8x256xf32> to vector<8x64xf32>
    %399 = vector.extract_strided_slice %395 {offsets = [0, 192], sizes = [8, 64], strides = [1, 1]} : vector<8x256xf32> to vector<8x64xf32>
    %400 = arith.mulf %397, %345 : vector<8x64xf32>
    %401 = arith.mulf %396, %398 : vector<8x64xf32>
    %402 = arith.addf %400, %401 : vector<8x64xf32>
    %403 = math.tanh %402 : vector<8x64xf32>
    %404 = arith.mulf %399, %403 : vector<8x64xf32>
    %405 = arith.index_cast %c6_i32 : i32 to index
    %c0_92 = arith.constant 0 : index
    %c0_93 = arith.constant 0 : index
    %406 = vector.load %arg11[%405, %c0_92, %c0_93] : memref<8x8x64xf32, #tpu.memory_space<vmem>>, vector<1x8x64xf32>
    %407 = vector.shape_cast %406 : vector<1x8x64xf32> to vector<8x64xf32>
    %408 = vector.shape_cast %404 : vector<8x64xf32> to vector<1x8x64xf32>
    tpu.vector_store %arg11[%405, %c0_92, %c0_93], %408 {strides = array<i32>} : memref<8x8x64xf32, #tpu.memory_space<vmem>>, vector<1x8x64xf32>,
    %c7_i32 = arith.constant 7 : i32
    %409 = arith.index_cast %c7_i32 : i32 to index
    %c0_94 = arith.constant 0 : index
    %c0_95 = arith.constant 0 : index
    %410 = vector.load %arg2[%409, %c0_94, %c0_95] : memref<8x8x128xf32, #tpu.memory_space<vmem>>, vector<1x8x128xf32>
    %411 = vector.shape_cast %410 : vector<1x8x128xf32> to vector<8x128xf32>
    %cst_96 = arith.constant dense<0.000000e+00> : vector<8x128xf32>
    %412 = tpu.matmul %378, %3, %cst_96 {dimension_numbers = #tpu.dot_dimension_numbers<[1], [0], [0], [1], [0, 0, 1, 1], [], []>} : vector<8x32xf32>, vector<32x128xf32>, vector<8x128xf32> -> vector<8x128xf32>
    %413 = arith.addf %411, %412 : vector<8x128xf32>
    %414 = tpu.iota {dimensions = array<i32: 1>} : vector<8x128xi32>
    %c64_i32_97 = arith.constant 64 : i32
    %415 = vector.broadcast %c64_i32_97 : i32 to vector<8x128xi32>
    %416 = arith.cmpi sge, %414, %415 : vector<8x128xi32>
    %c96_i32_98 = arith.constant 96 : i32
    %417 = vector.broadcast %c96_i32_98 : i32 to vector<8x128xi32>
    %418 = arith.cmpi slt, %414, %417 : vector<8x128xi32>
    %419 = arith.andi %416, %418 : vector<8x128xi1>
    %420 = math.tanh %413 : vector<8x128xf32>
    %421 = arith.negf %413 : vector<8x128xf32>
    %422 = math.exp %421 : vector<8x128xf32>
    %cst_99 = arith.constant 1.000000e+00 : f32
    %423 = vector.broadcast %cst_99 : f32 to vector<8x128xf32>
    %424 = arith.addf %423, %422 : vector<8x128xf32>
    %425 = arith.divf %423, %424 : vector<8x128xf32>
    %426 = arith.select %419, %420, %425 : vector<8x128xi1>, vector<8x128xf32>
    %427 = vector.extract_strided_slice %426 {offsets = [0, 0], sizes = [8, 32], strides = [1, 1]} : vector<8x128xf32> to vector<8x32xf32>
    %428 = vector.extract_strided_slice %426 {offsets = [0, 32], sizes = [8, 32], strides = [1, 1]} : vector<8x128xf32> to vector<8x32xf32>
    %429 = vector.extract_strided_slice %426 {offsets = [0, 64], sizes = [8, 32], strides = [1, 1]} : vector<8x128xf32> to vector<8x32xf32>
    %430 = vector.extract_strided_slice %426 {offsets = [0, 96], sizes = [8, 32], strides = [1, 1]} : vector<8x128xf32> to vector<8x32xf32>
    %431 = arith.mulf %428, %376 : vector<8x32xf32>
    %432 = arith.mulf %427, %429 : vector<8x32xf32>
    %433 = arith.addf %431, %432 : vector<8x32xf32>
    %434 = math.tanh %433 : vector<8x32xf32>
    %435 = arith.mulf %430, %434 : vector<8x32xf32>
    %436 = tpu.concatenate %435, %404 in 1 : vector<8x32xf32>, vector<8x64xf32> -> vector<8x96xf32>
    %cst_100 = arith.constant dense<0.000000e+00> : vector<8x256xf32>
    %437 = tpu.matmul %436, %4, %cst_100 {dimension_numbers = #tpu.dot_dimension_numbers<[1], [0], [0], [1], [0, 0, 1, 1], [], []>} : vector<8x96xf32>, vector<96x256xf32>, vector<8x256xf32> -> vector<8x256xf32>
    %438 = vector.broadcast %5 : vector<1x256xf32> to vector<8x256xf32>
    %439 = arith.addf %437, %438 : vector<8x256xf32>
    %440 = tpu.iota {dimensions = array<i32: 1>} : vector<8x256xi32>
    %c128_i32_101 = arith.constant 128 : i32
    %441 = vector.broadcast %c128_i32_101 : i32 to vector<8x256xi32>
    %442 = arith.cmpi sge, %440, %441 : vector<8x256xi32>
    %c192_i32_102 = arith.constant 192 : i32
    %443 = vector.broadcast %c192_i32_102 : i32 to vector<8x256xi32>
    %444 = arith.cmpi slt, %440, %443 : vector<8x256xi32>
    %445 = arith.andi %442, %444 : vector<8x256xi1>
    %446 = math.tanh %439 : vector<8x256xf32>
    %447 = arith.negf %439 : vector<8x256xf32>
    %448 = math.exp %447 : vector<8x256xf32>
    %cst_103 = arith.constant 1.000000e+00 : f32
    %449 = vector.broadcast %cst_103 : f32 to vector<8x256xf32>
    %450 = arith.addf %449, %448 : vector<8x256xf32>
    %451 = arith.divf %449, %450 : vector<8x256xf32>
    %452 = arith.select %445, %446, %451 : vector<8x256xi1>, vector<8x256xf32>
    %453 = vector.extract_strided_slice %452 {offsets = [0, 0], sizes = [8, 64], strides = [1, 1]} : vector<8x256xf32> to vector<8x64xf32>
    %454 = vector.extract_strided_slice %452 {offsets = [0, 64], sizes = [8, 64], strides = [1, 1]} : vector<8x256xf32> to vector<8x64xf32>
    %455 = vector.extract_strided_slice %452 {offsets = [0, 128], sizes = [8, 64], strides = [1, 1]} : vector<8x256xf32> to vector<8x64xf32>
    %456 = vector.extract_strided_slice %452 {offsets = [0, 192], sizes = [8, 64], strides = [1, 1]} : vector<8x256xf32> to vector<8x64xf32>
    %457 = arith.mulf %454, %402 : vector<8x64xf32>
    %458 = arith.mulf %453, %455 : vector<8x64xf32>
    %459 = arith.addf %457, %458 : vector<8x64xf32>
    %460 = math.tanh %459 : vector<8x64xf32>
    %461 = arith.mulf %456, %460 : vector<8x64xf32>
    %462 = arith.index_cast %c7_i32 : i32 to index
    %c0_104 = arith.constant 0 : index
    %c0_105 = arith.constant 0 : index
    %463 = vector.load %arg11[%462, %c0_104, %c0_105] : memref<8x8x64xf32, #tpu.memory_space<vmem>>, vector<1x8x64xf32>
    %464 = vector.shape_cast %463 : vector<1x8x64xf32> to vector<8x64xf32>
    %465 = vector.shape_cast %461 : vector<8x64xf32> to vector<1x8x64xf32>
    tpu.vector_store %arg11[%462, %c0_104, %c0_105], %465 {strides = array<i32>} : memref<8x8x64xf32, #tpu.memory_space<vmem>>, vector<1x8x64xf32>,
    %c8_i32 = arith.constant 8 : i32
    %c0_106 = arith.constant 0 : index
    %c0_107 = arith.constant 0 : index
    %466 = vector.load %arg12[%c0_106, %c0_107] : memref<8x32xf32, #tpu.memory_space<vmem>>, vector<8x32xf32>
    tpu.vector_store %arg12[%c0_106, %c0_107], %435 {strides = array<i32>} : memref<8x32xf32, #tpu.memory_space<vmem>>, vector<8x32xf32>,
    %c0_108 = arith.constant 0 : index
    %c0_109 = arith.constant 0 : index
    %467 = vector.load %arg13[%c0_108, %c0_109] : memref<8x32xf32, #tpu.memory_space<vmem>>, vector<8x32xf32>
    tpu.vector_store %arg13[%c0_108, %c0_109], %433 {strides = array<i32>} : memref<8x32xf32, #tpu.memory_space<vmem>>, vector<8x32xf32>,
    %c0_110 = arith.constant 0 : index
    %c0_111 = arith.constant 0 : index
    %468 = vector.load %arg14[%c0_110, %c0_111] : memref<8x64xf32, #tpu.memory_space<vmem>>, vector<8x64xf32>
    tpu.vector_store %arg14[%c0_110, %c0_111], %461 {strides = array<i32>} : memref<8x64xf32, #tpu.memory_space<vmem>>, vector<8x64xf32>,
    %c0_112 = arith.constant 0 : index
    %c0_113 = arith.constant 0 : index
    %469 = vector.load %arg15[%c0_112, %c0_113] : memref<8x64xf32, #tpu.memory_space<vmem>>, vector<8x64xf32>
    tpu.vector_store %arg15[%c0_112, %c0_113], %459 {strides = array<i32>} : memref<8x64xf32, #tpu.memory_space<vmem>>, vector<8x64xf32>,
    %c0_114 = arith.constant 0 : index
    %c0_115 = arith.constant 0 : index
    %c0_116 = arith.constant 0 : index
    %470 = vector.load %arg11[%c0_114, %c0_115, %c0_116] : memref<8x8x64xf32, #tpu.memory_space<vmem>>, vector<8x8x64xf32>
    %c0_117 = arith.constant 0 : index
    %c0_118 = arith.constant 0 : index
    %471 = vector.load %arg6[%c0_117, %c0_118] : memref<1x64xf32, #tpu.memory_space<vmem>>, vector<1x64xf32>
    %472 = vector.shape_cast %471 : vector<1x64xf32> to vector<1x1x64xf32>
    %473 = vector.broadcast %472 : vector<1x1x64xf32> to vector<8x8x64xf32>
    %474 = arith.mulf %470, %473 : vector<8x8x64xf32>
    %cst_119 = arith.constant dense<0.000000e+00> : vector<8x8xf32>
    %475 = vector.multi_reduction <add>, %474, %cst_119 [2] : vector<8x8x64xf32> to vector<8x8xf32>
    %476 = vector.shape_cast %475 : vector<8x8xf32> to vector<8x8x1xf32>
    %c0_120 = arith.constant 0 : index
    %c0_121 = arith.constant 0 : index
    %477 = vector.load %arg7[%c0_120, %c0_121] : memref<1x1xf32, #tpu.memory_space<vmem>>, vector<1x1xf32>
    %478 = vector.shape_cast %477 : vector<1x1xf32> to vector<1x1x1xf32>
    %479 = vector.broadcast %478 : vector<1x1x1xf32> to vector<8x8x1xf32>
    %480 = arith.addf %476, %479 : vector<8x8x1xf32>
    %481 = math.tanh %480 : vector<8x8x1xf32>
    %c0_122 = arith.constant 0 : index
    %482 = memref.load %arg1[%c0_122] : memref<1xi32, #tpu.memory_space<smem>>
    %c8_i32_123 = arith.constant 8 : i32
    %483 = arith.muli %arg0, %c8_i32_123 : i32
    %484 = tpu.iota {dimensions = array<i32: 0>} : vector<8x8x1xi32>
    %485 = vector.broadcast %483 : i32 to vector<8x8x1xi32>
    %486 = arith.addi %485, %484 : vector<8x8x1xi32>
    %487 = vector.broadcast %482 : i32 to vector<8x8x1xi32>
    %488 = arith.cmpi slt, %486, %487 : vector<8x8x1xi32>
    %cst_124 = arith.constant -1.000000e+30 : f32
    %489 = vector.broadcast %cst_124 : f32 to vector<8x8x1xf32>
    %490 = arith.select %488, %481, %489 : vector<8x8x1xi1>, vector<8x8x1xf32>
    %c0_125 = arith.constant 0 : index
    %c0_126 = arith.constant 0 : index
    %491 = vector.load %arg17[%c0_125, %c0_126] : memref<8x1xf32, #tpu.memory_space<vmem>>, vector<8x1xf32>
    %c0_127 = arith.constant 0 : index
    %c0_128 = arith.constant 0 : index
    %492 = vector.load %arg18[%c0_127, %c0_128] : memref<8x1xf32, #tpu.memory_space<vmem>>, vector<8x1xf32>
    %c0_129 = arith.constant 0 : index
    %c0_130 = arith.constant 0 : index
    %493 = vector.load %arg16[%c0_129, %c0_130] : memref<8x64xf32, #tpu.memory_space<vmem>>, vector<8x64xf32>
    %cst_131 = arith.constant dense<0xFF800000> : vector<8x1xf32>
    %494 = vector.multi_reduction <maximumf>, %490, %cst_131 [0] : vector<8x8x1xf32> to vector<8x1xf32>
    %495 = arith.maximumf %491, %494 : vector<8x1xf32>
    %496 = arith.subf %491, %495 : vector<8x1xf32>
    %497 = math.exp %496 : vector<8x1xf32>
    %498 = vector.shape_cast %495 : vector<8x1xf32> to vector<1x8x1xf32>
    %499 = vector.broadcast %498 : vector<1x8x1xf32> to vector<8x8x1xf32>
    %500 = arith.subf %490, %499 : vector<8x8x1xf32>
    %501 = math.exp %500 : vector<8x8x1xf32>
    %502 = arith.extui %488 : vector<8x8x1xi1> to vector<8x8x1xi32>
    %503 = arith.sitofp %502 : vector<8x8x1xi32> to vector<8x8x1xf32>
    %504 = arith.mulf %501, %503 : vector<8x8x1xf32>
    %505 = arith.mulf %497, %492 : vector<8x1xf32>
    %cst_132 = arith.constant dense<0.000000e+00> : vector<8x1xf32>
    %506 = vector.multi_reduction <add>, %504, %cst_132 [0] : vector<8x8x1xf32> to vector<8x1xf32>
    %507 = arith.addf %505, %506 : vector<8x1xf32>
    %508 = vector.broadcast %497 : vector<8x1xf32> to vector<8x64xf32>
    %509 = arith.mulf %508, %493 : vector<8x64xf32>
    %510 = vector.broadcast %504 : vector<8x8x1xf32> to vector<8x8x64xf32>
    %511 = arith.mulf %510, %470 : vector<8x8x64xf32>
    %cst_133 = arith.constant dense<0.000000e+00> : vector<8x64xf32>
    %512 = vector.multi_reduction <add>, %511, %cst_133 [0] : vector<8x8x64xf32> to vector<8x64xf32>
    %513 = arith.addf %509, %512 : vector<8x64xf32>
    %c0_134 = arith.constant 0 : index
    %c0_135 = arith.constant 0 : index
    %514 = vector.load %arg17[%c0_134, %c0_135] : memref<8x1xf32, #tpu.memory_space<vmem>>, vector<8x1xf32>
    tpu.vector_store %arg17[%c0_134, %c0_135], %495 {strides = array<i32>} : memref<8x1xf32, #tpu.memory_space<vmem>>, vector<8x1xf32>,
    %c0_136 = arith.constant 0 : index
    %c0_137 = arith.constant 0 : index
    %515 = vector.load %arg18[%c0_136, %c0_137] : memref<8x1xf32, #tpu.memory_space<vmem>>, vector<8x1xf32>
    tpu.vector_store %arg18[%c0_136, %c0_137], %507 {strides = array<i32>} : memref<8x1xf32, #tpu.memory_space<vmem>>, vector<8x1xf32>,
    %c0_138 = arith.constant 0 : index
    %c0_139 = arith.constant 0 : index
    %516 = vector.load %arg16[%c0_138, %c0_139] : memref<8x64xf32, #tpu.memory_space<vmem>>, vector<8x64xf32>
    tpu.vector_store %arg16[%c0_138, %c0_139], %513 {strides = array<i32>} : memref<8x64xf32, #tpu.memory_space<vmem>>, vector<8x64xf32>,
    %c0_i32_140 = arith.constant 0 : i32
    %517 = arith.cmpi eq, %arg0, %c0_i32_140 : i32
    %518 = arith.extui %517 : i1 to i32
    %c0_i32_141 = arith.constant 0 : i32
    %519 = arith.cmpi ne, %518, %c0_i32_141 : i32
    scf.if %519 {
      %520 = arith.sitofp %482 : i32 to f32
      %521 = vector.broadcast %520 : f32 to vector<8x1xf32>
      %522 = arith.mulf %507, %521 : vector<8x1xf32>
      %523 = vector.broadcast %522 : vector<8x1xf32> to vector<8x64xf32>
      %524 = arith.divf %513, %523 : vector<8x64xf32>
      %c0_142 = arith.constant 0 : index
      %c0_143 = arith.constant 0 : index
      %525 = vector.load %arg8[%c0_142, %c0_143] : memref<64x1xf32, #tpu.memory_space<vmem>>, vector<64x1xf32>
      %cst_144 = arith.constant dense<0.000000e+00> : vector<8x1xf32>
      %526 = tpu.matmul %524, %525, %cst_144 {dimension_numbers = #tpu.dot_dimension_numbers<[1], [0], [0], [1], [0, 0, 1, 1], [], []>} : vector<8x64xf32>, vector<64x1xf32>, vector<8x1xf32> -> vector<8x1xf32>
      %c0_145 = arith.constant 0 : index
      %c0_146 = arith.constant 0 : index
      %527 = vector.load %arg9[%c0_145, %c0_146] : memref<1x1xf32, #tpu.memory_space<vmem>>, vector<1x1xf32>
      %528 = vector.broadcast %527 : vector<1x1xf32> to vector<8x1xf32>
      %529 = arith.addf %526, %528 : vector<8x1xf32>
      %c0_147 = arith.constant 0 : index
      %c0_148 = arith.constant 0 : index
      %530 = vector.load %arg10[%c0_147, %c0_148] : memref<8x1xf32, #tpu.memory_space<vmem>>, vector<8x1xf32>
      tpu.vector_store %arg10[%c0_147, %c0_148], %529 {strides = array<i32>} : memref<8x1xf32, #tpu.memory_space<vmem>>, vector<8x1xf32>,
    } else {
    }
    return
  }
  func.func @transform_0(%arg0: i32, %arg1: memref<1xi32, #tpu.memory_space<smem>>) -> (i32, i32, i32) {
    %c0_i32 = arith.constant 0 : i32
    %c0_i32_0 = arith.constant 0 : i32
    %c0_i32_1 = arith.constant 0 : i32
    return %arg0, %c0_i32, %c0_i32_0 : i32, i32, i32
  }
  func.func @transform_1(%arg0: i32, %arg1: memref<1xi32, #tpu.memory_space<smem>>) -> (i32, i32) {
    %c0_i32 = arith.constant 0 : i32
    %c0_i32_0 = arith.constant 0 : i32
    %c0_i32_1 = arith.constant 0 : i32
    return %c0_i32, %c0_i32_0 : i32, i32
  }
  func.func @transform_2(%arg0: i32, %arg1: memref<1xi32, #tpu.memory_space<smem>>) -> (i32, i32) {
    %c0_i32 = arith.constant 0 : i32
    %c0_i32_0 = arith.constant 0 : i32
    %c0_i32_1 = arith.constant 0 : i32
    return %c0_i32, %c0_i32_0 : i32, i32
  }
  func.func @transform_3(%arg0: i32, %arg1: memref<1xi32, #tpu.memory_space<smem>>) -> (i32, i32) {
    %c0_i32 = arith.constant 0 : i32
    %c0_i32_0 = arith.constant 0 : i32
    %c0_i32_1 = arith.constant 0 : i32
    return %c0_i32, %c0_i32_0 : i32, i32
  }
  func.func @transform_4(%arg0: i32, %arg1: memref<1xi32, #tpu.memory_space<smem>>) -> (i32, i32) {
    %c0_i32 = arith.constant 0 : i32
    %c0_i32_0 = arith.constant 0 : i32
    %c0_i32_1 = arith.constant 0 : i32
    return %c0_i32, %c0_i32_0 : i32, i32
  }
  func.func @transform_5(%arg0: i32, %arg1: memref<1xi32, #tpu.memory_space<smem>>) -> (i32, i32) {
    %c0_i32 = arith.constant 0 : i32
    %c0_i32_0 = arith.constant 0 : i32
    %c0_i32_1 = arith.constant 0 : i32
    return %c0_i32, %c0_i32_0 : i32, i32
  }
  func.func @transform_6(%arg0: i32, %arg1: memref<1xi32, #tpu.memory_space<smem>>) -> (i32, i32) {
    %c0_i32 = arith.constant 0 : i32
    %c0_i32_0 = arith.constant 0 : i32
    %c0_i32_1 = arith.constant 0 : i32
    return %c0_i32, %c0_i32_0 : i32, i32
  }
  func.func @transform_7(%arg0: i32, %arg1: memref<1xi32, #tpu.memory_space<smem>>) -> (i32, i32) {
    %c0_i32 = arith.constant 0 : i32
    %c0_i32_0 = arith.constant 0 : i32
    %c0_i32_1 = arith.constant 0 : i32
    return %c0_i32, %c0_i32_0 : i32, i32
  }
  func.func @transform_8(%arg0: i32, %arg1: memref<1xi32, #tpu.memory_space<smem>>) -> (i32, i32) {
    %c0_i32 = arith.constant 0 : i32
    %c0_i32_0 = arith.constant 0 : i32
    %c0_i32_1 = arith.constant 0 : i32
    return %c0_i32, %c0_i32_0 : i32, i32
  }
}

</mosaic_0001>

<llo_original>
// kernel: tpu_custom_call.1
$region0: #{tpu_custom_call.1}
  #allocation0 [shape = 'u32[]', space=smem, size = 0x4, offset = 0x4, fixed_abs, tag = 'smem constant byte address 0x4 - core index']
  #allocation1 [shape = 'u32[72,128]{1,0:T(1,128)}', space=vmem, size = 0x9000, scoped, tag = 'internal scratch']
  #allocation2 [shape = 'f32[8,8,64]{2,1,0:T(8,128)}', space=vmem, size = 0x8000, scoped, tag = 'scratch operand']
  #allocation3 [shape = 'f32[8,32]{1,0:T(8,128)}', space=vmem, size = 0x1000, scoped, tag = 'scratch operand']
  #allocation4 [shape = 'f32[8,32]{1,0:T(8,128)}', space=vmem, size = 0x1000, scoped, tag = 'scratch operand']
  #allocation5 [shape = 'f32[8,64]{1,0:T(8,128)}', space=vmem, size = 0x1000, scoped, tag = 'scratch operand']
  #allocation6 [shape = 'f32[8,64]{1,0:T(8,128)}', space=vmem, size = 0x1000, scoped, tag = 'scratch operand']
  #allocation7 [shape = 'f32[8,64]{1,0:T(8,128)}', space=vmem, size = 0x1000, scoped, tag = 'scratch operand']
  #allocation8 [shape = 'f32[8,1]{1,0:T(8,128)}', space=vmem, size = 0x1000, scoped, tag = 'scratch operand']
  #allocation9 [shape = 'f32[8,1]{1,0:T(8,128)}', space=vmem, size = 0x1000, scoped, tag = 'scratch operand']
  #allocation10 [shape = 's32[1]{0}', space=sflag, size = 0x4, scoped, tag = 'scoped memory for tpu_custom_call.1']
  #allocation11 [shape = 's32[1]{0:T(128)S(6)}', space=smem, size = 0x200, scoped, tag = 'prefetched SMEM operand 0']
  #allocation12 [shape = 'f32[1,1]{1,0:T(1,128)S(1)}', space=vmem, size = 0x200, scoped, tag = 'scoped memory for tpu_custom_call.1']
  #allocation13 [shape = 'f32[1,1]{1,0:T(1,128)S(1)}', space=vmem, size = 0x200, scoped, tag = 'scoped memory for tpu_custom_call.1']
  %s0 = inlined_call_operand.<no memory space> [shape: s32[1], index: 0, kind: input, shape index: {}]
  %s1 = inlined_call_operand.vmem [shape: f32[8,8,128], index: 1, kind: input, shape index: {}]
  %s2 = inlined_call_operand.hbm [shape: f32[32,128], index: 2, kind: input, shape index: {}]
  %s3 = inlined_call_operand.hbm [shape: f32[96,256], index: 3, kind: input, shape index: {}]
  %s4 = inlined_call_operand.vmem [shape: f32[1,256], index: 4, kind: input, shape index: {}]
  %s5 = inlined_call_operand.vmem [shape: f32[1,64], index: 5, kind: input, shape index: {}]
  %s6 = inlined_call_operand.<no memory space> [shape: f32[1,1], index: 6, kind: input, shape index: {}]
  %s7 = inlined_call_operand.vmem [shape: f32[64,1], index: 7, kind: input, shape index: {}]
  %s8 = inlined_call_operand.<no memory space> [shape: f32[1,1], index: 8, kind: input, shape index: {}]
  %s9 = inlined_call_operand.vmem [shape: f32[8,1], index: 9, kind: output, shape index: {}]
  %s10 = sld [smem:[#allocation0]]
  $region58: #{tpu_custom_call.1} parent=0
    _
  %s12 = ssub.s32 1, %s10
  %s13 = scalar_select 0, %s12, %s10
  %14 = sst [smem:[#allocation11]] %s0
  %v15 = vstv %s6
  %16 = vst [vmem:[#allocation12] sm:$0x1] %v15
  %v17 = vstv %s8
  %18 = vst [vmem:[#allocation13] sm:$0x1] %v17
  $region1: #{tpu_custom_call.1} parent=0
    #allocation14 [shape = 'u8[16384]{0}', space=vmem, size = 0x4000, scoped, tag = 'input window, operand 2, single buffered']
    #allocation15 [shape = 's32[1]{0}', space=sflag, size = 0x4, scoped, tag = 'scoped memory for tpu_custom_call.1']
    #allocation16 [shape = 'u8[98304]{0}', space=vmem, size = 0x18000, scoped, tag = 'input window, operand 3, single buffered']
    #allocation17 [shape = 's32[1]{0}', space=sflag, size = 0x4, scoped, tag = 'scoped memory for tpu_custom_call.1']
    %19 = vsyncpa [#allocation15], 0
    %20 = vsyncpa [#allocation17], 0
    // Predicated region
    $region2: #{tpu_custom_call.1} parent=1 // pred_check
      _
    $region3: #{tpu_custom_call.1} parent=1 // pred_check_branch
      %22 = sbr.rel (0) target = $region5
    $region4: #{tpu_custom_call.1} parent=1 // pred_region
      _
    $region5: #{tpu_custom_call.1} parent=1 // pred_fallthru
      _
    // Predicated region
    $region6: #{tpu_custom_call.1} parent=1 // pred_check
      _
    $region7: #{tpu_custom_call.1} parent=1 // pred_check_branch
      %24 = sbr.rel (0) target = $region9
    $region8: #{tpu_custom_call.1} parent=1 // pred_region
      %26 = vsyncadd [#allocation15], 0
      %s27 = sshll.u32 %s2, 4
      %s28 = int_to_ptr.hbm [resolvable:$true] %s27
      %s29 = sshll.u32 [#allocation14], 4
      %s30 = int_to_ptr.vmem [resolvable:$true] %s29
      %35 = dma.hbm_to_vmem [thread:$0]  %s28, 512, %s30, [#allocation15], 128, 128, 8
    $region9: #{tpu_custom_call.1} parent=1 // pred_fallthru
      _
    // Predicated region
    $region10: #{tpu_custom_call.1} parent=1 // pred_check
      _
    $region11: #{tpu_custom_call.1} parent=1 // pred_check_branch
      %37 = sbr.rel (0) target = $region13
    $region12: #{tpu_custom_call.1} parent=1 // pred_region
      %39 = vsyncadd [#allocation17], 0
      %s40 = sshll.u32 %s3, 4
      %s41 = int_to_ptr.hbm [resolvable:$true] %s40
      %s42 = sshll.u32 [#allocation16], 4
      %s43 = int_to_ptr.vmem [resolvable:$true] %s42
      %48 = dma.hbm_to_vmem [thread:$0]  %s41, 3072, %s43, [#allocation17], 256, 256, 16
    $region13: #{tpu_custom_call.1} parent=1 // pred_fallthru
      _
    // Predicated region
    $region14: #{tpu_custom_call.1} parent=1 // pred_check
      _
    $region15: #{tpu_custom_call.1} parent=1 // pred_check_branch
      %50 = sbr.rel (0) target = $region17
    $region16: #{tpu_custom_call.1} parent=1 // pred_region
      _
    $region17: #{tpu_custom_call.1} parent=1 // pred_fallthru
      _
    // Predicated region
    $region18: #{tpu_custom_call.1} parent=1 // pred_check
      _
    $region19: #{tpu_custom_call.1} parent=1 // pred_check_branch
      %52 = sbr.rel (0) target = $region21
    $region20: #{tpu_custom_call.1} parent=1 // pred_region
      _
    $region21: #{tpu_custom_call.1} parent=1 // pred_fallthru
      _
    // Predicated region
    $region22: #{tpu_custom_call.1} parent=1 // pred_check
      _
    $region23: #{tpu_custom_call.1} parent=1 // pred_check_branch
      %54 = sbr.rel (0) target = $region25
    $region24: #{tpu_custom_call.1} parent=1 // pred_region
      _
    $region25: #{tpu_custom_call.1} parent=1 // pred_fallthru
      _
    // Predicated region
    $region26: #{tpu_custom_call.1} parent=1 // pred_check
      _
    $region27: #{tpu_custom_call.1} parent=1 // pred_check_branch
      %56 = sbr.rel (0) target = $region29
    $region28: #{tpu_custom_call.1} parent=1 // pred_region
      _
    $region29: #{tpu_custom_call.1} parent=1 // pred_fallthru
      _
    // Predicated region
    $region30: #{tpu_custom_call.1} parent=1 // pred_check
      _
    $region31: #{tpu_custom_call.1} parent=1 // pred_check_branch
      %58 = sbr.rel (0) target = $region33
    $region32: #{tpu_custom_call.1} parent=1 // pred_region
      _
    $region33: #{tpu_custom_call.1} parent=1 // pred_fallthru
      _
    // Predicated region
    $region34: #{tpu_custom_call.1} parent=1 // pred_check
      _
    $region35: #{tpu_custom_call.1} parent=1 // pred_check_branch
      %60 = sbr.rel (0) target = $region37
    $region36: #{tpu_custom_call.1} parent=1 // pred_region
      %62 = dma.done [#allocation15], 512
    $region37: #{tpu_custom_call.1} parent=1 // pred_fallthru
      _
    // Predicated region
    $region38: #{tpu_custom_call.1} parent=1 // pred_check
      _
    $region39: #{tpu_custom_call.1} parent=1 // pred_check_branch
      %64 = sbr.rel (0) target = $region41
    $region40: #{tpu_custom_call.1} parent=1 // pred_region
      %66 = dma.done [#allocation17], 3072
    $region41: #{tpu_custom_call.1} parent=1 // pred_fallthru
      _
    %p67 = scmp.eq.s32.totalorder 0, 0
    // Predicated region
    $region42: #{tpu_custom_call.1} parent=1 // pred_check
      %p68 = pneg %p67
    $region43: #{tpu_custom_call.1} parent=1 // pred_check_branch
      %70 = sbr.rel (%p68) target = $region45
    $region44: #{tpu_custom_call.1} parent=1 // pred_region
      %vm71 = vcmask 261120
      %72 = vst.msk [vmem:[#allocation3] sm:$0xff] %vm71, 0.0
      %73 = vst.msk [vmem:[#allocation4] sm:$0xff] %vm71, 0.0
      %vm74 = vcmask 523264
      %75 = vst.msk [vmem:[#allocation5] sm:$0xff] %vm74, 0.0
      %76 = vst.msk [vmem:[#allocation6] sm:$0xff] %vm74, 0.0
      %77 = vst.msk [vmem:[#allocation7] sm:$0xff] %vm74, 0.0
      %vm78 = vcmask 7168
      %79 = vst.msk [vmem:[#allocation8] sm:$0xff] %vm78, -1e+30
      %80 = vst.msk [vmem:[#allocation9] sm:$0xff] %vm78, 0.0
    $region45: #{tpu_custom_call.1} parent=1 // pred_fallthru
      _
    %v81 = vld [vmem:[#allocation14] sm:$0xff]
    %v82 = vld [vmem:[#allocation14 + $0x8] sm:$0xff]
    %v83 = vld [vmem:[#allocation14 + $0x10] sm:$0xff]
    %v84 = vld [vmem:[#allocation14 + $0x18] sm:$0xff]
    %v85 = vld [vmem:[#allocation16] sm:$0xff]
    %v86 = vld [vmem:[#allocation16 + $0x8] sm:$0xff]
    %v87 = vld [vmem:[#allocation16 + $0x10] sm:$0xff]
    %v88 = vld [vmem:[#allocation16 + $0x18] sm:$0xff]
    %v89 = vld [vmem:[#allocation16 + $0x20] sm:$0xff]
    %v90 = vld [vmem:[#allocation16 + $0x28] sm:$0xff]
    %v91 = vld [vmem:[#allocation16 + $0x30] sm:$0xff]
    %v92 = vld [vmem:[#allocation16 + $0x38] sm:$0xff]
    %v93 = vld [vmem:[#allocation16 + $0x40] sm:$0xff]
    %v94 = vld [vmem:[#allocation16 + $0x48] sm:$0xff]
    %v95 = vld [vmem:[#allocation16 + $0x50] sm:$0xff]
    %v96 = vld [vmem:[#allocation16 + $0x58] sm:$0xff]
    %v97 = vld [vmem:[#allocation16 + $0x60] sm:$0xff]
    %v98 = vld [vmem:[#allocation16 + $0x68] sm:$0xff]
    %v99 = vld [vmem:[#allocation16 + $0x70] sm:$0xff]
    %v100 = vld [vmem:[#allocation16 + $0x78] sm:$0xff]
    %v101 = vld [vmem:[#allocation16 + $0x80] sm:$0xff]
    %v102 = vld [vmem:[#allocation16 + $0x88] sm:$0xff]
    %v103 = vld [vmem:[#allocation16 + $0x90] sm:$0xff]
    %v104 = vld [vmem:[#allocation16 + $0x98] sm:$0xff]
    %v105 = vld [vmem:[#allocation16 + $0xa0] sm:$0xff]
    %v106 = vld [vmem:[#allocation16 + $0xa8] sm:$0xff]
    %v107 = vld [vmem:[#allocation16 + $0xb0] sm:$0xff]
    %v108 = vld [vmem:[#allocation16 + $0xb8] sm:$0xff]
    %v109 = vld [vmem:[%s4] sm:$0x3]
    %v110 = vld [vmem:[#allocation3] sm:$0xff]
    %v111 = vld [vmem:[#allocation4] sm:$0xff]
    %v112 = vld [vmem:[#allocation5] sm:$0xff]
    %v113 = vld [vmem:[#allocation6] sm:$0xff]
    %v114 = vld [vmem:[%s1] sm:$0xff]
    %vm115 = vcmask 261120
    %v117 = vsel %vm115, %v110, 0
    %119 = vmatpush.msra.mxu0 0.0
    %120 = vmatpush.msra.mxu0 0.0
    %121 = vmatpush.msra.mxu0 0.0
    %122 = vmatpush.msra.mxu0 0.0
    %123 = vmatpush.msra.mxu0 0.0
    %124 = vmatpush.msra.mxu0 0.0
    %125 = vmatpush.msra.mxu0 0.0
    %126 = vmatpush.msra.mxu0 0.0
    %127 = vmatpush.msra.mxu0 0.0
    %128 = vmatpush.msra.mxu0 0.0
    %129 = vmatpush.msra.mxu0 0.0
    %130 = vmatpush.msra.mxu0 0.0
    %131 = vmatpush.msra.mxu0 %v84
    %132 = vmatpush.msra.mxu0 %v83
    %133 = vmatpush.msra.mxu0 %v82
    %134 = vmatpush.msra.mxu0 %v81
    %135 = vmatmul.f32.gmra.mxu0 %v117
    %v136 = vpop.f32.mrf.mxu0
    %v137 = vadd.f32 0.0, %v136
    %138 = vdwg.mxu0
    %v139 = vadd.f32 %v114, %v137
    %v140 = vlaneseq
    %v141 = vand.u32 %v140, 127
    %vm142 = vcmp.ge.s32.totalorder %v141, 64
    %vm143 = vcmp.lt.s32.totalorder %v141, 96
    %vm144 = vmand %vm142, %vm143
    %v145 = vtanh.pop %v139
    %v146 = vxor.u32 %v139, 2147483648
    %v147 = vmul.f32 %v146, 1.442695
    %v148 = vpow.pop %v147
    %v149 = vadd.f32 %v148, 1.0
    %v150 = vrcp.pop %v149
    %v151 = vmul.f32 %v149, %v150
    %v152 = vsub.f32 1.0, %v151
    %v153 = vmul.f32 %v150, %v152
    %v154 = vadd.f32 %v150, %v153
    %vm155 = vweird.f32 %v149
    %vm156 = vweird.f32 %v150
    %vm157 = vmor %vm155, %vm156
    %v158 = vsel %vm157, %v150, %v154
    %v159 = vand.u32 2147483647, %v149
    %vm160 = vcmp.eq.f32.partialorder %v159, 8.507059e+37
    %v161 = vand.u32 %v149, 2147483648
    %v162 = vor.u32 1.1754944e-38, %v161
    %v163 = vsel %vm160, %v162, %v158
    %v164 = vmul.f32 1.0, %v163
    %v165 = vsel %vm144, %v145, %v164
    %167 = vrot.lane.b32.xlu0 %v111, 32
    %v168 = vpop.permute.xlu0 %167
    %v170 = vmul.f32 %v165, %v168
    %172 = vrot.lane.b32.xlu0 %v165, 64
    %v173 = vpop.permute.xlu0 %172
    %v175 = vmul.f32 %v165, %v173
    %177 = vrot.lane.b32.xlu0 %v175, 32
    %v178 = vpop.permute.xlu0 %177
    %v180 = vadd.f32 %v170, %v178
    %v181 = vtanh.pop %v180
    %183 = vrot.lane.b32.xlu0 %v181, 64
    %v184 = vpop.permute.xlu0 %183
    %v186 = vmul.f32 %v165, %v184
    %188 = vrot.lane.b32.xlu0 %v186, 32
    %v189 = vpop.permute.xlu0 %188
    %192 = vrot.lane.b32.xlu0 %v112, 32
    %v193 = vpop.permute.xlu0 %192
    %v195 = vsel %vm115, %v189, %v193
    %v197 = vperm.slane %v109, 0
    %v198 = vperm.slane %v109, 1
    %vm201 = vcmask 785408
    %v203 = vsel %vm201, %v195, 0
    %205 = vmatpush.msra.mxu0 0.0
    %206 = vmatpush.msra.mxu0 0.0
    %207 = vmatpush.msra.mxu0 0.0
    %208 = vmatpush.msra.mxu0 0.0
    %209 = vmatpush.msra.mxu0 %v107
    %210 = vmatpush.msra.mxu0 %v105
    %211 = vmatpush.msra.mxu0 %v103
    %212 = vmatpush.msra.mxu0 %v101
    %213 = vmatpush.msra.mxu0 %v99
    %214 = vmatpush.msra.mxu0 %v97
    %215 = vmatpush.msra.mxu0 %v95
    %216 = vmatpush.msra.mxu0 %v93
    %217 = vmatpush.msra.mxu0 %v91
    %218 = vmatpush.msra.mxu0 %v89
    %219 = vmatpush.msra.mxu0 %v87
    %220 = vmatpush.msra.mxu0 %v85
    %221 = vmatmul.f32.gmra.mxu0 %v203
    %v222 = vpop.f32.mrf.mxu0
    %v223 = vadd.f32 %v197, %v222
    %224 = vdwg.mxu0
    %225 = vmatpush.msra.mxu0 0.0
    %226 = vmatpush.msra.mxu0 0.0
    %227 = vmatpush.msra.mxu0 0.0
    %228 = vmatpush.msra.mxu0 0.0
    %229 = vmatpush.msra.mxu0 %v108
    %230 = vmatpush.msra.mxu0 %v106
    %231 = vmatpush.msra.mxu0 %v104
    %232 = vmatpush.msra.mxu0 %v102
    %233 = vmatpush.msra.mxu0 %v100
    %234 = vmatpush.msra.mxu0 %v98
    %235 = vmatpush.msra.mxu0 %v96
    %236 = vmatpush.msra.mxu0 %v94
    %237 = vmatpush.msra.mxu0 %v92
    %238 = vmatpush.msra.mxu0 %v90
    %239 = vmatpush.msra.mxu0 %v88
    %240 = vmatpush.msra.mxu0 %v86
    %241 = vmatmul.f32.gmra.mxu0 %v203
    %v242 = vpop.f32.mrf.mxu0
    %v243 = vadd.f32 %v198, %v242
    %244 = vdwg.mxu0
    %v245 = vadd.s32 %v141, 128
    %vm246 = vcmp.ge.s32.totalorder %v141, 128
    %vm247 = vcmp.ge.s32.totalorder %v245, 128
    %vm248 = vcmp.lt.s32.totalorder %v141, 192
    %vm249 = vcmp.lt.s32.totalorder %v245, 192
    %vm250 = vmand %vm246, %vm248
    %vm251 = vmand %vm247, %vm249
    %v252 = vtanh.pop %v223
    %v253 = vtanh.pop %v243
    %v254 = vxor.u32 %v223, 2147483648
    %v255 = vxor.u32 %v243, 2147483648
    %v256 = vmul.f32 %v254, 1.442695
    %v257 = vpow.pop %v256
    %v258 = vmul.f32 %v255, 1.442695
    %v259 = vpow.pop %v258
    %v260 = vadd.f32 %v257, 1.0
    %v261 = vadd.f32 %v259, 1.0
    %v262 = vrcp.pop %v260
    %v263 = vmul.f32 %v260, %v262
    %v264 = vsub.f32 1.0, %v263
    %v265 = vmul.f32 %v262, %v264
    %v266 = vadd.f32 %v262, %v265
    %vm267 = vweird.f32 %v260
    %vm268 = vweird.f32 %v262
    %vm269 = vmor %vm267, %vm268
    %v270 = vsel %vm269, %v262, %v266
    %v271 = vand.u32 2147483647, %v260
    %vm272 = vcmp.eq.f32.partialorder %v271, 8.507059e+37
    %v273 = vand.u32 %v260, 2147483648
    %v274 = vor.u32 1.1754944e-38, %v273
    %v275 = vsel %vm272, %v274, %v270
    %v276 = vmul.f32 1.0, %v275
    %v277 = vrcp.pop %v261
    %v278 = vmul.f32 %v261, %v277
    %v279 = vsub.f32 1.0, %v278
    %v280 = vmul.f32 %v277, %v279
    %v281 = vadd.f32 %v277, %v280
    %vm282 = vweird.f32 %v261
    %vm283 = vweird.f32 %v277
    %vm284 = vmor %vm282, %vm283
    %v285 = vsel %vm284, %v277, %v281
    %v286 = vand.u32 2147483647, %v261
    %vm287 = vcmp.eq.f32.partialorder %v286, 8.507059e+37
    %v288 = vand.u32 %v261, 2147483648
    %v289 = vor.u32 1.1754944e-38, %v288
    %v290 = vsel %vm287, %v289, %v285
    %v291 = vmul.f32 1.0, %v290
    %v292 = vsel %vm250, %v252, %v276
    %v293 = vsel %vm251, %v253, %v291
    %295 = vrot.lane.b32.xlu0 %v113, 64
    %v296 = vpop.permute.xlu0 %295
    %v298 = vmul.f32 %v292, %v296
    %v299 = vmul.f32 %v292, %v293
    %301 = vrot.lane.b32.xlu0 %v299, 64
    %v302 = vpop.permute.xlu0 %301
    %v304 = vadd.f32 %v298, %v302
    %v305 = vtanh.pop %v304
    %v306 = vmul.f32 %v293, %v305
    %308 = vrot.lane.b32.xlu0 %v306, 64
    %v309 = vpop.permute.xlu0 %308
    %vm311 = vcmask 523264
    %312 = vst.msk [vmem:[#allocation2] sm:$0xff] %vm311, %v309
    %s313 = scalar_lea.vmem %s1, 8
    %v314 = vld [vmem:[%s313] sm:$0xff]
    %v315 = vsel %vm115, %v189, 0
    %317 = vmatpush.msra.mxu0 0.0
    %318 = vmatpush.msra.mxu0 0.0
    %319 = vmatpush.msra.mxu0 0.0
    %320 = vmatpush.msra.mxu0 0.0
    %321 = vmatpush.msra.mxu0 0.0
    %322 = vmatpush.msra.mxu0 0.0
    %323 = vmatpush.msra.mxu0 0.0
    %324 = vmatpush.msra.mxu0 0.0
    %325 = vmatpush.msra.mxu0 0.0
    %326 = vmatpush.msra.mxu0 0.0
    %327 = vmatpush.msra.mxu0 0.0
    %328 = vmatpush.msra.mxu0 0.0
    %329 = vmatpush.msra.mxu0 %v84
    %330 = vmatpush.msra.mxu0 %v83
    %331 = vmatpush.msra.mxu0 %v82
    %332 = vmatpush.msra.mxu0 %v81
    %333 = vmatmul.f32.gmra.mxu0 %v315
    %v334 = vpop.f32.mrf.mxu0
    %v335 = vadd.f32 0.0, %v334
    %336 = vdwg.mxu0
    %v337 = vadd.f32 %v314, %v335
    %v338 = vtanh.pop %v337
    %v339 = vxor.u32 %v337, 2147483648
    %v340 = vmul.f32 %v339, 1.442695
    %v341 = vpow.pop %v340
    %v342 = vadd.f32 %v341, 1.0
    %v343 = vrcp.pop %v342
    %v344 = vmul.f32 %v342, %v343
    %v345 = vsub.f32 1.0, %v344
    %v346 = vmul.f32 %v343, %v345
    %v347 = vadd.f32 %v343, %v346
    %vm348 = vweird.f32 %v342
    %vm349 = vweird.f32 %v343
    %vm350 = vmor %vm348, %vm349
    %v351 = vsel %vm350, %v343, %v347
    %v352 = vand.u32 2147483647, %v342
    %vm353 = vcmp.eq.f32.partialorder %v352, 8.507059e+37
    %v354 = vand.u32 %v342, 2147483648
    %v355 = vor.u32 1.1754944e-38, %v354
    %v356 = vsel %vm353, %v355, %v351
    %v357 = vmul.f32 1.0, %v356
    %v358 = vsel %vm144, %v338, %v357
    %v359 = vmul.f32 %v358, %v180
    %361 = vrot.lane.b32.xlu0 %v358, 64
    %v362 = vpop.permute.xlu0 %361
    %v364 = vmul.f32 %v358, %v362
    %366 = vrot.lane.b32.xlu0 %v364, 32
    %v367 = vpop.permute.xlu0 %366
    %v369 = vadd.f32 %v359, %v367
    %v370 = vtanh.pop %v369
    %372 = vrot.lane.b32.xlu0 %v370, 64
    %v373 = vpop.permute.xlu0 %372
    %v375 = vmul.f32 %v358, %v373
    %377 = vrot.lane.b32.xlu0 %v375, 32
    %v378 = vpop.permute.xlu0 %377
    %380 = vrot.lane.b32.xlu0 %v306, 96
    %v381 = vpop.permute.xlu0 %380
    %v383 = vsel %vm115, %v378, %v381
    %v385 = vsel %vm201, %v383, 0
    %387 = vmatpush.msra.mxu0 0.0
    %388 = vmatpush.msra.mxu0 0.0
    %389 = vmatpush.msra.mxu0 0.0
    %390 = vmatpush.msra.mxu0 0.0
    %391 = vmatpush.msra.mxu0 %v107
    %392 = vmatpush.msra.mxu0 %v105
    %393 = vmatpush.msra.mxu0 %v103
    %394 = vmatpush.msra.mxu0 %v101
    %395 = vmatpush.msra.mxu0 %v99
    %396 = vmatpush.msra.mxu0 %v97
    %397 = vmatpush.msra.mxu0 %v95
    %398 = vmatpush.msra.mxu0 %v93
    %399 = vmatpush.msra.mxu0 %v91
    %400 = vmatpush.msra.mxu0 %v89
    %401 = vmatpush.msra.mxu0 %v87
    %402 = vmatpush.msra.mxu0 %v85
    %403 = vmatmul.f32.gmra.mxu0 %v385
    %v404 = vpop.f32.mrf.mxu0
    %v405 = vadd.f32 %v197, %v404
    %406 = vdwg.mxu0
    %407 = vmatpush.msra.mxu0 0.0
    %408 = vmatpush.msra.mxu0 0.0
    %409 = vmatpush.msra.mxu0 0.0
    %410 = vmatpush.msra.mxu0 0.0
    %411 = vmatpush.msra.mxu0 %v108
    %412 = vmatpush.msra.mxu0 %v106
    %413 = vmatpush.msra.mxu0 %v104
    %414 = vmatpush.msra.mxu0 %v102
    %415 = vmatpush.msra.mxu0 %v100
    %416 = vmatpush.msra.mxu0 %v98
    %417 = vmatpush.msra.mxu0 %v96
    %418 = vmatpush.msra.mxu0 %v94
    %419 = vmatpush.msra.mxu0 %v92
    %420 = vmatpush.msra.mxu0 %v90
    %421 = vmatpush.msra.mxu0 %v88
    %422 = vmatpush.msra.mxu0 %v86
    %423 = vmatmul.f32.gmra.mxu0 %v385
    %v424 = vpop.f32.mrf.mxu0
    %v425 = vadd.f32 %v198, %v424
    %426 = vdwg.mxu0
    %v427 = vtanh.pop %v405
    %v428 = vtanh.pop %v425
    %v429 = vxor.u32 %v405, 2147483648
    %v430 = vxor.u32 %v425, 2147483648
    %v431 = vmul.f32 %v429, 1.442695
    %v432 = vpow.pop %v431
    %v433 = vmul.f32 %v430, 1.442695
    %v434 = vpow.pop %v433
    %v435 = vadd.f32 %v432, 1.0
    %v436 = vadd.f32 %v434, 1.0
    %v437 = vrcp.pop %v435
    %v438 = vmul.f32 %v435, %v437
    %v439 = vsub.f32 1.0, %v438
    %v440 = vmul.f32 %v437, %v439
    %v441 = vadd.f32 %v437, %v440
    %vm442 = vweird.f32 %v435
    %vm443 = vweird.f32 %v437
    %vm444 = vmor %vm442, %vm443
    %v445 = vsel %vm444, %v437, %v441
    %v446 = vand.u32 2147483647, %v435
    %vm447 = vcmp.eq.f32.partialorder %v446, 8.507059e+37
    %v448 = vand.u32 %v435, 2147483648
    %v449 = vor.u32 1.1754944e-38, %v448
    %v450 = vsel %vm447, %v449, %v445
    %v451 = vmul.f32 1.0, %v450
    %v452 = vrcp.pop %v436
    %v453 = vmul.f32 %v436, %v452
    %v454 = vsub.f32 1.0, %v453
    %v455 = vmul.f32 %v452, %v454
    %v456 = vadd.f32 %v452, %v455
    %vm457 = vweird.f32 %v436
    %vm458 = vweird.f32 %v452
    %vm459 = vmor %vm457, %vm458
    %v460 = vsel %vm459, %v452, %v456
    %v461 = vand.u32 2147483647, %v436
    %vm462 = vcmp.eq.f32.partialorder %v461, 8.507059e+37
    %v463 = vand.u32 %v436, 2147483648
    %v464 = vor.u32 1.1754944e-38, %v463
    %v465 = vsel %vm462, %v464, %v460
    %v466 = vmul.f32 1.0, %v465
    %v467 = vsel %vm250, %v427, %v451
    %v468 = vsel %vm251, %v428, %v466
    %v469 = vmul.f32 %v467, %v304
    %v470 = vmul.f32 %v467, %v468
    %472 = vrot.lane.b32.xlu0 %v470, 64
    %v473 = vpop.permute.xlu0 %472
    %v475 = vadd.f32 %v469, %v473
    %v476 = vtanh.pop %v475
    %v477 = vmul.f32 %v468, %v476
    %479 = vrot.lane.b32.xlu0 %v477, 64
    %v480 = vpop.permute.xlu0 %479
    %s482 = scalar_lea.vmem [#allocation2], 8
    %483 = vst.msk [vmem:[%s482] sm:$0xff] %vm311, %v480
    %s484 = scalar_lea.vmem %s1, 16
    %v485 = vld [vmem:[%s484] sm:$0xff]
    %v486 = vsel %vm115, %v378, 0
    %488 = vmatpush.msra.mxu0 0.0
    %489 = vmatpush.msra.mxu0 0.0
    %490 = vmatpush.msra.mxu0 0.0
    %491 = vmatpush.msra.mxu0 0.0
    %492 = vmatpush.msra.mxu0 0.0
    %493 = vmatpush.msra.mxu0 0.0
    %494 = vmatpush.msra.mxu0 0.0
    %495 = vmatpush.msra.mxu0 0.0
    %496 = vmatpush.msra.mxu0 0.0
    %497 = vmatpush.msra.mxu0 0.0
    %498 = vmatpush.msra.mxu0 0.0
    %499 = vmatpush.msra.mxu0 0.0
    %500 = vmatpush.msra.mxu0 %v84
    %501 = vmatpush.msra.mxu0 %v83
    %502 = vmatpush.msra.mxu0 %v82
    %503 = vmatpush.msra.mxu0 %v81
    %504 = vmatmul.f32.gmra.mxu0 %v486
    %v505 = vpop.f32.mrf.mxu0
    %v506 = vadd.f32 0.0, %v505
    %507 = vdwg.mxu0
    %v508 = vadd.f32 %v485, %v506
    %v509 = vtanh.pop %v508
    %v510 = vxor.u32 %v508, 2147483648
    %v511 = vmul.f32 %v510, 1.442695
    %v512 = vpow.pop %v511
    %v513 = vadd.f32 %v512, 1.0
    %v514 = vrcp.pop %v513
    %v515 = vmul.f32 %v513, %v514
    %v516 = vsub.f32 1.0, %v515
    %v517 = vmul.f32 %v514, %v516
    %v518 = vadd.f32 %v514, %v517
    %vm519 = vweird.f32 %v513
    %vm520 = vweird.f32 %v514
    %vm521 = vmor %vm519, %vm520
    %v522 = vsel %vm521, %v514, %v518
    %v523 = vand.u32 2147483647, %v513
    %vm524 = vcmp.eq.f32.partialorder %v523, 8.507059e+37
    %v525 = vand.u32 %v513, 2147483648
    %v526 = vor.u32 1.1754944e-38, %v525
    %v527 = vsel %vm524, %v526, %v522
    %v528 = vmul.f32 1.0, %v527
    %v529 = vsel %vm144, %v509, %v528
    %v530 = vmul.f32 %v529, %v369
    %532 = vrot.lane.b32.xlu0 %v529, 64
    %v533 = vpop.permute.xlu0 %532
    %v535 = vmul.f32 %v529, %v533
    %537 = vrot.lane.b32.xlu0 %v535, 32
    %v538 = vpop.permute.xlu0 %537
    %v540 = vadd.f32 %v530, %v538
    %v541 = vtanh.pop %v540
    %543 = vrot.lane.b32.xlu0 %v541, 64
    %v544 = vpop.permute.xlu0 %543
    %v546 = vmul.f32 %v529, %v544
    %548 = vrot.lane.b32.xlu0 %v546, 32
    %v549 = vpop.permute.xlu0 %548
    %551 = vrot.lane.b32.xlu0 %v477, 96
    %v552 = vpop.permute.xlu0 %551
    %v554 = vsel %vm115, %v549, %v552
    %v556 = vsel %vm201, %v554, 0
    %558 = vmatpush.msra.mxu0 0.0
    %559 = vmatpush.msra.mxu0 0.0
    %560 = vmatpush.msra.mxu0 0.0
    %561 = vmatpush.msra.mxu0 0.0
    %562 = vmatpush.msra.mxu0 %v107
    %563 = vmatpush.msra.mxu0 %v105
    %564 = vmatpush.msra.mxu0 %v103
    %565 = vmatpush.msra.mxu0 %v101
    %566 = vmatpush.msra.mxu0 %v99
    %567 = vmatpush.msra.mxu0 %v97
    %568 = vmatpush.msra.mxu0 %v95
    %569 = vmatpush.msra.mxu0 %v93
    %570 = vmatpush.msra.mxu0 %v91
    %571 = vmatpush.msra.mxu0 %v89
    %572 = vmatpush.msra.mxu0 %v87
    %573 = vmatpush.msra.mxu0 %v85
    %574 = vmatmul.f32.gmra.mxu0 %v556
    %v575 = vpop.f32.mrf.mxu0
    %v576 = vadd.f32 %v197, %v575
    %577 = vdwg.mxu0
    %578 = vmatpush.msra.mxu0 0.0
    %579 = vmatpush.msra.mxu0 0.0
    %580 = vmatpush.msra.mxu0 0.0
    %581 = vmatpush.msra.mxu0 0.0
    %582 = vmatpush.msra.mxu0 %v108
    %583 = vmatpush.msra.mxu0 %v106
    %584 = vmatpush.msra.mxu0 %v104
    %585 = vmatpush.msra.mxu0 %v102
    %586 = vmatpush.msra.mxu0 %v100
    %587 = vmatpush.msra.mxu0 %v98
    %588 = vmatpush.msra.mxu0 %v96
    %589 = vmatpush.msra.mxu0 %v94
    %590 = vmatpush.msra.mxu0 %v92
    %591 = vmatpush.msra.mxu0 %v90
    %592 = vmatpush.msra.mxu0 %v88
    %593 = vmatpush.msra.mxu0 %v86
    %594 = vmatmul.f32.gmra.mxu0 %v556
    %v595 = vpop.f32.mrf.mxu0
    %v596 = vadd.f32 %v198, %v595
    %597 = vdwg.mxu0
    %v598 = vtanh.pop %v576
    %v599 = vtanh.pop %v596
    %v600 = vxor.u32 %v576, 2147483648
    %v601 = vxor.u32 %v596, 2147483648
    %v602 = vmul.f32 %v600, 1.442695
    %v603 = vpow.pop %v602
    %v604 = vmul.f32 %v601, 1.442695
    %v605 = vpow.pop %v604
    %v606 = vadd.f32 %v603, 1.0
    %v607 = vadd.f32 %v605, 1.0
    %v608 = vrcp.pop %v606
    %v609 = vmul.f32 %v606, %v608
    %v610 = vsub.f32 1.0, %v609
    %v611 = vmul.f32 %v608, %v610
    %v612 = vadd.f32 %v608, %v611
    %vm613 = vweird.f32 %v606
    %vm614 = vweird.f32 %v608
    %vm615 = vmor %vm613, %vm614
    %v616 = vsel %vm615, %v608, %v612
    %v617 = vand.u32 2147483647, %v606
    %vm618 = vcmp.eq.f32.partialorder %v617, 8.507059e+37
    %v619 = vand.u32 %v606, 2147483648
    %v620 = vor.u32 1.1754944e-38, %v619
    %v621 = vsel %vm618, %v620, %v616
    %v622 = vmul.f32 1.0, %v621
    %v623 = vrcp.pop %v607
    %v624 = vmul.f32 %v607, %v623
    %v625 = vsub.f32 1.0, %v624
    %v626 = vmul.f32 %v623, %v625
    %v627 = vadd.f32 %v623, %v626
    %vm628 = vweird.f32 %v607
    %vm629 = vweird.f32 %v623
    %vm630 = vmor %vm628, %vm629
    %v631 = vsel %vm630, %v623, %v627
    %v632 = vand.u32 2147483647, %v607
    %vm633 = vcmp.eq.f32.partialorder %v632, 8.507059e+37
    %v634 = vand.u32 %v607, 2147483648
    %v635 = vor.u32 1.1754944e-38, %v634
    %v636 = vsel %vm633, %v635, %v631
    %v637 = vmul.f32 1.0, %v636
    %v638 = vsel %vm250, %v598, %v622
    %v639 = vsel %vm251, %v599, %v637
    %v640 = vmul.f32 %v638, %v475
    %v641 = vmul.f32 %v638, %v639
    %643 = vrot.lane.b32.xlu0 %v641, 64
    %v644 = vpop.permute.xlu0 %643
    %v646 = vadd.f32 %v640, %v644
    %v647 = vtanh.pop %v646
    %v648 = vmul.f32 %v639, %v647
    %650 = vrot.lane.b32.xlu0 %v648, 64
    %v651 = vpop.permute.xlu0 %650
    %s653 = scalar_lea.vmem [#allocation2], 16
    %654 = vst.msk [vmem:[%s653] sm:$0xff] %vm311, %v651
    %s655 = scalar_lea.vmem %s1, 24
    %v656 = vld [vmem:[%s655] sm:$0xff]
    %v657 = vsel %vm115, %v549, 0
    %659 = vmatpush.msra.mxu0 0.0
    %660 = vmatpush.msra.mxu0 0.0
    %661 = vmatpush.msra.mxu0 0.0
    %662 = vmatpush.msra.mxu0 0.0
    %663 = vmatpush.msra.mxu0 0.0
    %664 = vmatpush.msra.mxu0 0.0
    %665 = vmatpush.msra.mxu0 0.0
    %666 = vmatpush.msra.mxu0 0.0
    %667 = vmatpush.msra.mxu0 0.0
    %668 = vmatpush.msra.mxu0 0.0
    %669 = vmatpush.msra.mxu0 0.0
    %670 = vmatpush.msra.mxu0 0.0
    %671 = vmatpush.msra.mxu0 %v84
    %672 = vmatpush.msra.mxu0 %v83
    %673 = vmatpush.msra.mxu0 %v82
    %674 = vmatpush.msra.mxu0 %v81
    %675 = vmatmul.f32.gmra.mxu0 %v657
    %v676 = vpop.f32.mrf.mxu0
    %v677 = vadd.f32 0.0, %v676
    %678 = vdwg.mxu0
    %v679 = vadd.f32 %v656, %v677
    %v680 = vtanh.pop %v679
    %v681 = vxor.u32 %v679, 2147483648
    %v682 = vmul.f32 %v681, 1.442695
    %v683 = vpow.pop %v682
    %v684 = vadd.f32 %v683, 1.0
    %v685 = vrcp.pop %v684
    %v686 = vmul.f32 %v684, %v685
    %v687 = vsub.f32 1.0, %v686
    %v688 = vmul.f32 %v685, %v687
    %v689 = vadd.f32 %v685, %v688
    %vm690 = vweird.f32 %v684
    %vm691 = vweird.f32 %v685
    %vm692 = vmor %vm690, %vm691
    %v693 = vsel %vm692, %v685, %v689
    %v694 = vand.u32 2147483647, %v684
    %vm695 = vcmp.eq.f32.partialorder %v694, 8.507059e+37
    %v696 = vand.u32 %v684, 2147483648
    %v697 = vor.u32 1.1754944e-38, %v696
    %v698 = vsel %vm695, %v697, %v693
    %v699 = vmul.f32 1.0, %v698
    %v700 = vsel %vm144, %v680, %v699
    %v701 = vmul.f32 %v700, %v540
    %703 = vrot.lane.b32.xlu0 %v700, 64
    %v704 = vpop.permute.xlu0 %703
    %v706 = vmul.f32 %v700, %v704
    %708 = vrot.lane.b32.xlu0 %v706, 32
    %v709 = vpop.permute.xlu0 %708
    %v711 = vadd.f32 %v701, %v709
    %v712 = vtanh.pop %v711
    %714 = vrot.lane.b32.xlu0 %v712, 64
    %v715 = vpop.permute.xlu0 %714
    %v717 = vmul.f32 %v700, %v715
    %719 = vrot.lane.b32.xlu0 %v717, 32
    %v720 = vpop.permute.xlu0 %719
    %722 = vrot.lane.b32.xlu0 %v648, 96
    %v723 = vpop.permute.xlu0 %722
    %v725 = vsel %vm115, %v720, %v723
    %v727 = vsel %vm201, %v725, 0
    %729 = vmatpush.msra.mxu0 0.0
    %730 = vmatpush.msra.mxu0 0.0
    %731 = vmatpush.msra.mxu0 0.0
    %732 = vmatpush.msra.mxu0 0.0
    %733 = vmatpush.msra.mxu0 %v107
    %734 = vmatpush.msra.mxu0 %v105
    %735 = vmatpush.msra.mxu0 %v103
    %736 = vmatpush.msra.mxu0 %v101
    %737 = vmatpush.msra.mxu0 %v99
    %738 = vmatpush.msra.mxu0 %v97
    %739 = vmatpush.msra.mxu0 %v95
    %740 = vmatpush.msra.mxu0 %v93
    %741 = vmatpush.msra.mxu0 %v91
    %742 = vmatpush.msra.mxu0 %v89
    %743 = vmatpush.msra.mxu0 %v87
    %744 = vmatpush.msra.mxu0 %v85
    %745 = vmatmul.f32.gmra.mxu0 %v727
    %v746 = vpop.f32.mrf.mxu0
    %v747 = vadd.f32 %v197, %v746
    %748 = vdwg.mxu0
    %749 = vmatpush.msra.mxu0 0.0
    %750 = vmatpush.msra.mxu0 0.0
    %751 = vmatpush.msra.mxu0 0.0
    %752 = vmatpush.msra.mxu0 0.0
    %753 = vmatpush.msra.mxu0 %v108
    %754 = vmatpush.msra.mxu0 %v106
    %755 = vmatpush.msra.mxu0 %v104
    %756 = vmatpush.msra.mxu0 %v102
    %757 = vmatpush.msra.mxu0 %v100
    %758 = vmatpush.msra.mxu0 %v98
    %759 = vmatpush.msra.mxu0 %v96
    %760 = vmatpush.msra.mxu0 %v94
    %761 = vmatpush.msra.mxu0 %v92
    %762 = vmatpush.msra.mxu0 %v90
    %763 = vmatpush.msra.mxu0 %v88
    %764 = vmatpush.msra.mxu0 %v86
    %765 = vmatmul.f32.gmra.mxu0 %v727
    %v766 = vpop.f32.mrf.mxu0
    %v767 = vadd.f32 %v198, %v766
    %768 = vdwg.mxu0
    %v769 = vtanh.pop %v747
    %v770 = vtanh.pop %v767
    %v771 = vxor.u32 %v747, 2147483648
    %v772 = vxor.u32 %v767, 2147483648
    %v773 = vmul.f32 %v771, 1.442695
    %v774 = vpow.pop %v773
    %v775 = vmul.f32 %v772, 1.442695
    %v776 = vpow.pop %v775
    %v777 = vadd.f32 %v774, 1.0
    %v778 = vadd.f32 %v776, 1.0
    %v779 = vrcp.pop %v777
    %v780 = vmul.f32 %v777, %v779
    %v781 = vsub.f32 1.0, %v780
    %v782 = vmul.f32 %v779, %v781
    %v783 = vadd.f32 %v779, %v782
    %vm784 = vweird.f32 %v777
    %vm785 = vweird.f32 %v779
    %vm786 = vmor %vm784, %vm785
    %v787 = vsel %vm786, %v779, %v783
    %v788 = vand.u32 2147483647, %v777
    %vm789 = vcmp.eq.f32.partialorder %v788, 8.507059e+37
    %v790 = vand.u32 %v777, 2147483648
    %v791 = vor.u32 1.1754944e-38, %v790
    %v792 = vsel %vm789, %v791, %v787
    %v793 = vmul.f32 1.0, %v792
    %v794 = vrcp.pop %v778
    %v795 = vmul.f32 %v778, %v794
    %v796 = vsub.f32 1.0, %v795
    %v797 = vmul.f32 %v794, %v796
    %v798 = vadd.f32 %v794, %v797
    %vm799 = vweird.f32 %v778
    %vm800 = vweird.f32 %v794
    %vm801 = vmor %vm799, %vm800
    %v802 = vsel %vm801, %v794, %v798
    %v803 = vand.u32 2147483647, %v778
    %vm804 = vcmp.eq.f32.partialorder %v803, 8.507059e+37
    %v805 = vand.u32 %v778, 2147483648
    %v806 = vor.u32 1.1754944e-38, %v805
    %v807 = vsel %vm804, %v806, %v802
    %v808 = vmul.f32 1.0, %v807
    %v809 = vsel %vm250, %v769, %v793
    %v810 = vsel %vm251, %v770, %v808
    %v811 = vmul.f32 %v809, %v646
    %v812 = vmul.f32 %v809, %v810
    %814 = vrot.lane.b32.xlu0 %v812, 64
    %v815 = vpop.permute.xlu0 %814
    %v817 = vadd.f32 %v811, %v815
    %v818 = vtanh.pop %v817
    %v819 = vmul.f32 %v810, %v818
    %821 = vrot.lane.b32.xlu0 %v819, 64
    %v822 = vpop.permute.xlu0 %821
    %s824 = scalar_lea.vmem [#allocation2], 24
    %825 = vst.msk [vmem:[%s824] sm:$0xff] %vm311, %v822
    %s826 = scalar_lea.vmem %s1, 32
    %v827 = vld [vmem:[%s826] sm:$0xff]
    %v828 = vsel %vm115, %v720, 0
    %830 = vmatpush.msra.mxu0 0.0
    %831 = vmatpush.msra.mxu0 0.0
    %832 = vmatpush.msra.mxu0 0.0
    %833 = vmatpush.msra.mxu0 0.0
    %834 = vmatpush.msra.mxu0 0.0
    %835 = vmatpush.msra.mxu0 0.0
    %836 = vmatpush.msra.mxu0 0.0
    %837 = vmatpush.msra.mxu0 0.0
    %838 = vmatpush.msra.mxu0 0.0
    %839 = vmatpush.msra.mxu0 0.0
    %840 = vmatpush.msra.mxu0 0.0
    %841 = vmatpush.msra.mxu0 0.0
    %842 = vmatpush.msra.mxu0 %v84
    %843 = vmatpush.msra.mxu0 %v83
    %844 = vmatpush.msra.mxu0 %v82
    %845 = vmatpush.msra.mxu0 %v81
    %846 = vmatmul.f32.gmra.mxu0 %v828
    %v847 = vpop.f32.mrf.mxu0
    %v848 = vadd.f32 0.0, %v847
    %849 = vdwg.mxu0
    %v850 = vadd.f32 %v827, %v848
    %v851 = vtanh.pop %v850
    %v852 = vxor.u32 %v850, 2147483648
    %v853 = vmul.f32 %v852, 1.442695
    %v854 = vpow.pop %v853
    %v855 = vadd.f32 %v854, 1.0
    %v856 = vrcp.pop %v855
    %v857 = vmul.f32 %v855, %v856
    %v858 = vsub.f32 1.0, %v857
    %v859 = vmul.f32 %v856, %v858
    %v860 = vadd.f32 %v856, %v859
    %vm861 = vweird.f32 %v855
    %vm862 = vweird.f32 %v856
    %vm863 = vmor %vm861, %vm862
    %v864 = vsel %vm863, %v856, %v860
    %v865 = vand.u32 2147483647, %v855
    %vm866 = vcmp.eq.f32.partialorder %v865, 8.507059e+37
    %v867 = vand.u32 %v855, 2147483648
    %v868 = vor.u32 1.1754944e-38, %v867
    %v869 = vsel %vm866, %v868, %v864
    %v870 = vmul.f32 1.0, %v869
    %v871 = vsel %vm144, %v851, %v870
    %v872 = vmul.f32 %v871, %v711
    %874 = vrot.lane.b32.xlu0 %v871, 64
    %v875 = vpop.permute.xlu0 %874
    %v877 = vmul.f32 %v871, %v875
    %879 = vrot.lane.b32.xlu0 %v877, 32
    %v880 = vpop.permute.xlu0 %879
    %v882 = vadd.f32 %v872, %v880
    %v883 = vtanh.pop %v882
    %885 = vrot.lane.b32.xlu0 %v883, 64
    %v886 = vpop.permute.xlu0 %885
    %v888 = vmul.f32 %v871, %v886
    %890 = vrot.lane.b32.xlu0 %v888, 32
    %v891 = vpop.permute.xlu0 %890
    %893 = vrot.lane.b32.xlu0 %v819, 96
    %v894 = vpop.permute.xlu0 %893
    %v896 = vsel %vm115, %v891, %v894
    %v898 = vsel %vm201, %v896, 0
    %900 = vmatpush.msra.mxu0 0.0
    %901 = vmatpush.msra.mxu0 0.0
    %902 = vmatpush.msra.mxu0 0.0
    %903 = vmatpush.msra.mxu0 0.0
    %904 = vmatpush.msra.mxu0 %v107
    %905 = vmatpush.msra.mxu0 %v105
    %906 = vmatpush.msra.mxu0 %v103
    %907 = vmatpush.msra.mxu0 %v101
    %908 = vmatpush.msra.mxu0 %v99
    %909 = vmatpush.msra.mxu0 %v97
    %910 = vmatpush.msra.mxu0 %v95
    %911 = vmatpush.msra.mxu0 %v93
    %912 = vmatpush.msra.mxu0 %v91
    %913 = vmatpush.msra.mxu0 %v89
    %914 = vmatpush.msra.mxu0 %v87
    %915 = vmatpush.msra.mxu0 %v85
    %916 = vmatmul.f32.gmra.mxu0 %v898
    %v917 = vpop.f32.mrf.mxu0
    %v918 = vadd.f32 %v197, %v917
    %919 = vdwg.mxu0
    %920 = vmatpush.msra.mxu0 0.0
    %921 = vmatpush.msra.mxu0 0.0
    %922 = vmatpush.msra.mxu0 0.0
    %923 = vmatpush.msra.mxu0 0.0
    %924 = vmatpush.msra.mxu0 %v108
    %925 = vmatpush.msra.mxu0 %v106
    %926 = vmatpush.msra.mxu0 %v104
    %927 = vmatpush.msra.mxu0 %v102
    %928 = vmatpush.msra.mxu0 %v100
    %929 = vmatpush.msra.mxu0 %v98
    %930 = vmatpush.msra.mxu0 %v96
    %931 = vmatpush.msra.mxu0 %v94
    %932 = vmatpush.msra.mxu0 %v92
    %933 = vmatpush.msra.mxu0 %v90
    %934 = vmatpush.msra.mxu0 %v88
    %935 = vmatpush.msra.mxu0 %v86
    %936 = vmatmul.f32.gmra.mxu0 %v898
    %v937 = vpop.f32.mrf.mxu0
    %v938 = vadd.f32 %v198, %v937
    %939 = vdwg.mxu0
    %v940 = vtanh.pop %v918
    %v941 = vtanh.pop %v938
    %v942 = vxor.u32 %v918, 2147483648
    %v943 = vxor.u32 %v938, 2147483648
    %v944 = vmul.f32 %v942, 1.442695
    %v945 = vpow.pop %v944
    %v946 = vmul.f32 %v943, 1.442695
    %v947 = vpow.pop %v946
    %v948 = vadd.f32 %v945, 1.0
    %v949 = vadd.f32 %v947, 1.0
    %v950 = vrcp.pop %v948
    %v951 = vmul.f32 %v948, %v950
    %v952 = vsub.f32 1.0, %v951
    %v953 = vmul.f32 %v950, %v952
    %v954 = vadd.f32 %v950, %v953
    %vm955 = vweird.f32 %v948
    %vm956 = vweird.f32 %v950
    %vm957 = vmor %vm955, %vm956
    %v958 = vsel %vm957, %v950, %v954
    %v959 = vand.u32 2147483647, %v948
    %vm960 = vcmp.eq.f32.partialorder %v959, 8.507059e+37
    %v961 = vand.u32 %v948, 2147483648
    %v962 = vor.u32 1.1754944e-38, %v961
    %v963 = vsel %vm960, %v962, %v958
    %v964 = vmul.f32 1.0, %v963
    %v965 = vrcp.pop %v949
    %v966 = vmul.f32 %v949, %v965
    %v967 = vsub.f32 1.0, %v966
    %v968 = vmul.f32 %v965, %v967
    %v969 = vadd.f32 %v965, %v968
    %vm970 = vweird.f32 %v949
    %vm971 = vweird.f32 %v965
    %vm972 = vmor %vm970, %vm971
    %v973 = vsel %vm972, %v965, %v969
    %v974 = vand.u32 2147483647, %v949
    %vm975 = vcmp.eq.f32.partialorder %v974, 8.507059e+37
    %v976 = vand.u32 %v949, 2147483648
    %v977 = vor.u32 1.1754944e-38, %v976
    %v978 = vsel %vm975, %v977, %v973
    %v979 = vmul.f32 1.0, %v978
    %v980 = vsel %vm250, %v940, %v964
    %v981 = vsel %vm251, %v941, %v979
    %v982 = vmul.f32 %v980, %v817
    %v983 = vmul.f32 %v980, %v981
    %985 = vrot.lane.b32.xlu0 %v983, 64
    %v986 = vpop.permute.xlu0 %985
    %v988 = vadd.f32 %v982, %v986
    %v989 = vtanh.pop %v988
    %v990 = vmul.f32 %v981, %v989
    %992 = vrot.lane.b32.xlu0 %v990, 64
    %v993 = vpop.permute.xlu0 %992
    %s995 = scalar_lea.vmem [#allocation2], 32
    %996 = vst.msk [vmem:[%s995] sm:$0xff] %vm311, %v993
    %s997 = scalar_lea.vmem %s1, 40
    %v998 = vld [vmem:[%s997] sm:$0xff]
    %v999 = vsel %vm115, %v891, 0
    %1001 = vmatpush.msra.mxu0 0.0
    %1002 = vmatpush.msra.mxu0 0.0
    %1003 = vmatpush.msra.mxu0 0.0
    %1004 = vmatpush.msra.mxu0 0.0
    %1005 = vmatpush.msra.mxu0 0.0
    %1006 = vmatpush.msra.mxu0 0.0
    %1007 = vmatpush.msra.mxu0 0.0
    %1008 = vmatpush.msra.mxu0 0.0
    %1009 = vmatpush.msra.mxu0 0.0
    %1010 = vmatpush.msra.mxu0 0.0
    %1011 = vmatpush.msra.mxu0 0.0
    %1012 = vmatpush.msra.mxu0 0.0
    %1013 = vmatpush.msra.mxu0 %v84
    %1014 = vmatpush.msra.mxu0 %v83
    %1015 = vmatpush.msra.mxu0 %v82
    %1016 = vmatpush.msra.mxu0 %v81
    %1017 = vmatmul.f32.gmra.mxu0 %v999
    %v1018 = vpop.f32.mrf.mxu0
    %v1019 = vadd.f32 0.0, %v1018
    %1020 = vdwg.mxu0
    %v1021 = vadd.f32 %v998, %v1019
    %v1022 = vtanh.pop %v1021
    %v1023 = vxor.u32 %v1021, 2147483648
    %v1024 = vmul.f32 %v1023, 1.442695
    %v1025 = vpow.pop %v1024
    %v1026 = vadd.f32 %v1025, 1.0
    %v1027 = vrcp.pop %v1026
    %v1028 = vmul.f32 %v1026, %v1027
    %v1029 = vsub.f32 1.0, %v1028
    %v1030 = vmul.f32 %v1027, %v1029
    %v1031 = vadd.f32 %v1027, %v1030
    %vm1032 = vweird.f32 %v1026
    %vm1033 = vweird.f32 %v1027
    %vm1034 = vmor %vm1032, %vm1033
    %v1035 = vsel %vm1034, %v1027, %v1031
    %v1036 = vand.u32 2147483647, %v1026
    %vm1037 = vcmp.eq.f32.partialorder %v1036, 8.507059e+37
    %v1038 = vand.u32 %v1026, 2147483648
    %v1039 = vor.u32 1.1754944e-38, %v1038
    %v1040 = vsel %vm1037, %v1039, %v1035
    %v1041 = vmul.f32 1.0, %v1040
    %v1042 = vsel %vm144, %v1022, %v1041
    %v1043 = vmul.f32 %v1042, %v882
    %1045 = vrot.lane.b32.xlu0 %v1042, 64
    %v1046 = vpop.permute.xlu0 %1045
    %v1048 = vmul.f32 %v1042, %v1046
    %1050 = vrot.lane.b32.xlu0 %v1048, 32
    %v1051 = vpop.permute.xlu0 %1050
    %v1053 = vadd.f32 %v1043, %v1051
    %v1054 = vtanh.pop %v1053
    %1056 = vrot.lane.b32.xlu0 %v1054, 64
    %v1057 = vpop.permute.xlu0 %1056
    %v1059 = vmul.f32 %v1042, %v1057
    %1061 = vrot.lane.b32.xlu0 %v1059, 32
    %v1062 = vpop.permute.xlu0 %1061
    %1064 = vrot.lane.b32.xlu0 %v990, 96
    %v1065 = vpop.permute.xlu0 %1064
    %v1067 = vsel %vm115, %v1062, %v1065
    %v1069 = vsel %vm201, %v1067, 0
    %1071 = vmatpush.msra.mxu0 0.0
    %1072 = vmatpush.msra.mxu0 0.0
    %1073 = vmatpush.msra.mxu0 0.0
    %1074 = vmatpush.msra.mxu0 0.0
    %1075 = vmatpush.msra.mxu0 %v107
    %1076 = vmatpush.msra.mxu0 %v105
    %1077 = vmatpush.msra.mxu0 %v103
    %1078 = vmatpush.msra.mxu0 %v101
    %1079 = vmatpush.msra.mxu0 %v99
    %1080 = vmatpush.msra.mxu0 %v97
    %1081 = vmatpush.msra.mxu0 %v95
    %1082 = vmatpush.msra.mxu0 %v93
    %1083 = vmatpush.msra.mxu0 %v91
    %1084 = vmatpush.msra.mxu0 %v89
    %1085 = vmatpush.msra.mxu0 %v87
    %1086 = vmatpush.msra.mxu0 %v85
    %1087 = vmatmul.f32.gmra.mxu0 %v1069
    %v1088 = vpop.f32.mrf.mxu0
    %v1089 = vadd.f32 %v197, %v1088
    %1090 = vdwg.mxu0
    %1091 = vmatpush.msra.mxu0 0.0
    %1092 = vmatpush.msra.mxu0 0.0
    %1093 = vmatpush.msra.mxu0 0.0
    %1094 = vmatpush.msra.mxu0 0.0
    %1095 = vmatpush.msra.mxu0 %v108
    %1096 = vmatpush.msra.mxu0 %v106
    %1097 = vmatpush.msra.mxu0 %v104
    %1098 = vmatpush.msra.mxu0 %v102
    %1099 = vmatpush.msra.mxu0 %v100
    %1100 = vmatpush.msra.mxu0 %v98
    %1101 = vmatpush.msra.mxu0 %v96
    %1102 = vmatpush.msra.mxu0 %v94
    %1103 = vmatpush.msra.mxu0 %v92
    %1104 = vmatpush.msra.mxu0 %v90
    %1105 = vmatpush.msra.mxu0 %v88
    %1106 = vmatpush.msra.mxu0 %v86
    %1107 = vmatmul.f32.gmra.mxu0 %v1069
    %v1108 = vpop.f32.mrf.mxu0
    %v1109 = vadd.f32 %v198, %v1108
    %1110 = vdwg.mxu0
    %v1111 = vtanh.pop %v1089
    %v1112 = vtanh.pop %v1109
    %v1113 = vxor.u32 %v1089, 2147483648
    %v1114 = vxor.u32 %v1109, 2147483648
    %v1115 = vmul.f32 %v1113, 1.442695
    %v1116 = vpow.pop %v1115
    %v1117 = vmul.f32 %v1114, 1.442695
    %v1118 = vpow.pop %v1117
    %v1119 = vadd.f32 %v1116, 1.0
    %v1120 = vadd.f32 %v1118, 1.0
    %v1121 = vrcp.pop %v1119
    %v1122 = vmul.f32 %v1119, %v1121
    %v1123 = vsub.f32 1.0, %v1122
    %v1124 = vmul.f32 %v1121, %v1123
    %v1125 = vadd.f32 %v1121, %v1124
    %vm1126 = vweird.f32 %v1119
    %vm1127 = vweird.f32 %v1121
    %vm1128 = vmor %vm1126, %vm1127
    %v1129 = vsel %vm1128, %v1121, %v1125
    %v1130 = vand.u32 2147483647, %v1119
    %vm1131 = vcmp.eq.f32.partialorder %v1130, 8.507059e+37
    %v1132 = vand.u32 %v1119, 2147483648
    %v1133 = vor.u32 1.1754944e-38, %v1132
    %v1134 = vsel %vm1131, %v1133, %v1129
    %v1135 = vmul.f32 1.0, %v1134
    %v1136 = vrcp.pop %v1120
    %v1137 = vmul.f32 %v1120, %v1136
    %v1138 = vsub.f32 1.0, %v1137
    %v1139 = vmul.f32 %v1136, %v1138
    %v1140 = vadd.f32 %v1136, %v1139
    %vm1141 = vweird.f32 %v1120
    %vm1142 = vweird.f32 %v1136
    %vm1143 = vmor %vm1141, %vm1142
    %v1144 = vsel %vm1143, %v1136, %v1140
    %v1145 = vand.u32 2147483647, %v1120
    %vm1146 = vcmp.eq.f32.partialorder %v1145, 8.507059e+37
    %v1147 = vand.u32 %v1120, 2147483648
    %v1148 = vor.u32 1.1754944e-38, %v1147
    %v1149 = vsel %vm1146, %v1148, %v1144
    %v1150 = vmul.f32 1.0, %v1149
    %v1151 = vsel %vm250, %v1111, %v1135
    %v1152 = vsel %vm251, %v1112, %v1150
    %v1153 = vmul.f32 %v1151, %v988
    %v1154 = vmul.f32 %v1151, %v1152
    %1156 = vrot.lane.b32.xlu0 %v1154, 64
    %v1157 = vpop.permute.xlu0 %1156
    %v1159 = vadd.f32 %v1153, %v1157
    %v1160 = vtanh.pop %v1159
    %v1161 = vmul.f32 %v1152, %v1160
    %1163 = vrot.lane.b32.xlu0 %v1161, 64
    %v1164 = vpop.permute.xlu0 %1163
    %s1166 = scalar_lea.vmem [#allocation2], 40
    %1167 = vst.msk [vmem:[%s1166] sm:$0xff] %vm311, %v1164
    %s1168 = scalar_lea.vmem %s1, 48
    %v1169 = vld [vmem:[%s1168] sm:$0xff]
    %v1170 = vsel %vm115, %v1062, 0
    %1172 = vmatpush.msra.mxu0 0.0
    %1173 = vmatpush.msra.mxu0 0.0
    %1174 = vmatpush.msra.mxu0 0.0
    %1175 = vmatpush.msra.mxu0 0.0
    %1176 = vmatpush.msra.mxu0 0.0
    %1177 = vmatpush.msra.mxu0 0.0
    %1178 = vmatpush.msra.mxu0 0.0
    %1179 = vmatpush.msra.mxu0 0.0
    %1180 = vmatpush.msra.mxu0 0.0
    %1181 = vmatpush.msra.mxu0 0.0
    %1182 = vmatpush.msra.mxu0 0.0
    %1183 = vmatpush.msra.mxu0 0.0
    %1184 = vmatpush.msra.mxu0 %v84
    %1185 = vmatpush.msra.mxu0 %v83
    %1186 = vmatpush.msra.mxu0 %v82
    %1187 = vmatpush.msra.mxu0 %v81
    %1188 = vmatmul.f32.gmra.mxu0 %v1170
    %v1189 = vpop.f32.mrf.mxu0
    %v1190 = vadd.f32 0.0, %v1189
    %1191 = vdwg.mxu0
    %v1192 = vadd.f32 %v1169, %v1190
    %v1193 = vtanh.pop %v1192
    %v1194 = vxor.u32 %v1192, 2147483648
    %v1195 = vmul.f32 %v1194, 1.442695
    %v1196 = vpow.pop %v1195
    %v1197 = vadd.f32 %v1196, 1.0
    %v1198 = vrcp.pop %v1197
    %v1199 = vmul.f32 %v1197, %v1198
    %v1200 = vsub.f32 1.0, %v1199
    %v1201 = vmul.f32 %v1198, %v1200
    %v1202 = vadd.f32 %v1198, %v1201
    %vm1203 = vweird.f32 %v1197
    %vm1204 = vweird.f32 %v1198
    %vm1205 = vmor %vm1203, %vm1204
    %v1206 = vsel %vm1205, %v1198, %v1202
    %v1207 = vand.u32 2147483647, %v1197
    %vm1208 = vcmp.eq.f32.partialorder %v1207, 8.507059e+37
    %v1209 = vand.u32 %v1197, 2147483648
    %v1210 = vor.u32 1.1754944e-38, %v1209
    %v1211 = vsel %vm1208, %v1210, %v1206
    %v1212 = vmul.f32 1.0, %v1211
    %v1213 = vsel %vm144, %v1193, %v1212
    %v1214 = vmul.f32 %v1213, %v1053
    %1216 = vrot.lane.b32.xlu0 %v1213, 64
    %v1217 = vpop.permute.xlu0 %1216
    %v1219 = vmul.f32 %v1213, %v1217
    %1221 = vrot.lane.b32.xlu0 %v1219, 32
    %v1222 = vpop.permute.xlu0 %1221
    %v1224 = vadd.f32 %v1214, %v1222
    %v1225 = vtanh.pop %v1224
    %1227 = vrot.lane.b32.xlu0 %v1225, 64
    %v1228 = vpop.permute.xlu0 %1227
    %v1230 = vmul.f32 %v1213, %v1228
    %1232 = vrot.lane.b32.xlu0 %v1230, 32
    %v1233 = vpop.permute.xlu0 %1232
    %1235 = vrot.lane.b32.xlu0 %v1161, 96
    %v1236 = vpop.permute.xlu0 %1235
    %v1238 = vsel %vm115, %v1233, %v1236
    %v1240 = vsel %vm201, %v1238, 0
    %1242 = vmatpush.msra.mxu0 0.0
    %1243 = vmatpush.msra.mxu0 0.0
    %1244 = vmatpush.msra.mxu0 0.0
    %1245 = vmatpush.msra.mxu0 0.0
    %1246 = vmatpush.msra.mxu0 %v107
    %1247 = vmatpush.msra.mxu0 %v105
    %1248 = vmatpush.msra.mxu0 %v103
    %1249 = vmatpush.msra.mxu0 %v101
    %1250 = vmatpush.msra.mxu0 %v99
    %1251 = vmatpush.msra.mxu0 %v97
    %1252 = vmatpush.msra.mxu0 %v95
    %1253 = vmatpush.msra.mxu0 %v93
    %1254 = vmatpush.msra.mxu0 %v91
    %1255 = vmatpush.msra.mxu0 %v89
    %1256 = vmatpush.msra.mxu0 %v87
    %1257 = vmatpush.msra.mxu0 %v85
    %1258 = vmatmul.f32.gmra.mxu0 %v1240
    %v1259 = vpop.f32.mrf.mxu0
    %v1260 = vadd.f32 %v197, %v1259
    %1261 = vdwg.mxu0
    %1262 = vmatpush.msra.mxu0 0.0
    %1263 = vmatpush.msra.mxu0 0.0
    %1264 = vmatpush.msra.mxu0 0.0
    %1265 = vmatpush.msra.mxu0 0.0
    %1266 = vmatpush.msra.mxu0 %v108
    %1267 = vmatpush.msra.mxu0 %v106
    %1268 = vmatpush.msra.mxu0 %v104
    %1269 = vmatpush.msra.mxu0 %v102
    %1270 = vmatpush.msra.mxu0 %v100
    %1271 = vmatpush.msra.mxu0 %v98
    %1272 = vmatpush.msra.mxu0 %v96
    %1273 = vmatpush.msra.mxu0 %v94
    %1274 = vmatpush.msra.mxu0 %v92
    %1275 = vmatpush.msra.mxu0 %v90
    %1276 = vmatpush.msra.mxu0 %v88
    %1277 = vmatpush.msra.mxu0 %v86
    %1278 = vmatmul.f32.gmra.mxu0 %v1240
    %v1279 = vpop.f32.mrf.mxu0
    %v1280 = vadd.f32 %v198, %v1279
    %1281 = vdwg.mxu0
    %v1282 = vtanh.pop %v1260
    %v1283 = vtanh.pop %v1280
    %v1284 = vxor.u32 %v1260, 2147483648
    %v1285 = vxor.u32 %v1280, 2147483648
    %v1286 = vmul.f32 %v1284, 1.442695
    %v1287 = vpow.pop %v1286
    %v1288 = vmul.f32 %v1285, 1.442695
    %v1289 = vpow.pop %v1288
    %v1290 = vadd.f32 %v1287, 1.0
    %v1291 = vadd.f32 %v1289, 1.0
    %v1292 = vrcp.pop %v1290
    %v1293 = vmul.f32 %v1290, %v1292
    %v1294 = vsub.f32 1.0, %v1293
    %v1295 = vmul.f32 %v1292, %v1294
    %v1296 = vadd.f32 %v1292, %v1295
    %vm1297 = vweird.f32 %v1290
    %vm1298 = vweird.f32 %v1292
    %vm1299 = vmor %vm1297, %vm1298
    %v1300 = vsel %vm1299, %v1292, %v1296
    %v1301 = vand.u32 2147483647, %v1290
    %vm1302 = vcmp.eq.f32.partialorder %v1301, 8.507059e+37
    %v1303 = vand.u32 %v1290, 2147483648
    %v1304 = vor.u32 1.1754944e-38, %v1303
    %v1305 = vsel %vm1302, %v1304, %v1300
    %v1306 = vmul.f32 1.0, %v1305
    %v1307 = vrcp.pop %v1291
    %v1308 = vmul.f32 %v1291, %v1307
    %v1309 = vsub.f32 1.0, %v1308
    %v1310 = vmul.f32 %v1307, %v1309
    %v1311 = vadd.f32 %v1307, %v1310
    %vm1312 = vweird.f32 %v1291
    %vm1313 = vweird.f32 %v1307
    %vm1314 = vmor %vm1312, %vm1313
    %v1315 = vsel %vm1314, %v1307, %v1311
    %v1316 = vand.u32 2147483647, %v1291
    %vm1317 = vcmp.eq.f32.partialorder %v1316, 8.507059e+37
    %v1318 = vand.u32 %v1291, 2147483648
    %v1319 = vor.u32 1.1754944e-38, %v1318
    %v1320 = vsel %vm1317, %v1319, %v1315
    %v1321 = vmul.f32 1.0, %v1320
    %v1322 = vsel %vm250, %v1282, %v1306
    %v1323 = vsel %vm251, %v1283, %v1321
    %v1324 = vmul.f32 %v1322, %v1159
    %v1325 = vmul.f32 %v1322, %v1323
    %1327 = vrot.lane.b32.xlu0 %v1325, 64
    %v1328 = vpop.permute.xlu0 %1327
    %v1330 = vadd.f32 %v1324, %v1328
    %v1331 = vtanh.pop %v1330
    %v1332 = vmul.f32 %v1323, %v1331
    %1334 = vrot.lane.b32.xlu0 %v1332, 64
    %v1335 = vpop.permute.xlu0 %1334
    %s1337 = scalar_lea.vmem [#allocation2], 48
    %1338 = vst.msk [vmem:[%s1337] sm:$0xff] %vm311, %v1335
    %s1339 = scalar_lea.vmem %s1, 56
    %v1340 = vld [vmem:[%s1339] sm:$0xff]
    %v1341 = vsel %vm115, %v1233, 0
    %1343 = vmatpush.msra.mxu0 0.0
    %1344 = vmatpush.msra.mxu0 0.0
    %1345 = vmatpush.msra.mxu0 0.0
    %1346 = vmatpush.msra.mxu0 0.0
    %1347 = vmatpush.msra.mxu0 0.0
    %1348 = vmatpush.msra.mxu0 0.0
    %1349 = vmatpush.msra.mxu0 0.0
    %1350 = vmatpush.msra.mxu0 0.0
    %1351 = vmatpush.msra.mxu0 0.0
    %1352 = vmatpush.msra.mxu0 0.0
    %1353 = vmatpush.msra.mxu0 0.0
    %1354 = vmatpush.msra.mxu0 0.0
    %1355 = vmatpush.msra.mxu0 %v84
    %1356 = vmatpush.msra.mxu0 %v83
    %1357 = vmatpush.msra.mxu0 %v82
    %1358 = vmatpush.msra.mxu0 %v81
    %1359 = vmatmul.f32.gmra.mxu0 %v1341
    %v1360 = vpop.f32.mrf.mxu0
    %v1361 = vadd.f32 0.0, %v1360
    %1362 = vdwg.mxu0
    %v1363 = vadd.f32 %v1340, %v1361
    %v1364 = vtanh.pop %v1363
    %v1365 = vxor.u32 %v1363, 2147483648
    %v1366 = vmul.f32 %v1365, 1.442695
    %v1367 = vpow.pop %v1366
    %v1368 = vadd.f32 %v1367, 1.0
    %v1369 = vrcp.pop %v1368
    %v1370 = vmul.f32 %v1368, %v1369
    %v1371 = vsub.f32 1.0, %v1370
    %v1372 = vmul.f32 %v1369, %v1371
    %v1373 = vadd.f32 %v1369, %v1372
    %vm1374 = vweird.f32 %v1368
    %vm1375 = vweird.f32 %v1369
    %vm1376 = vmor %vm1374, %vm1375
    %v1377 = vsel %vm1376, %v1369, %v1373
    %v1378 = vand.u32 2147483647, %v1368
    %vm1379 = vcmp.eq.f32.partialorder %v1378, 8.507059e+37
    %v1380 = vand.u32 %v1368, 2147483648
    %v1381 = vor.u32 1.1754944e-38, %v1380
    %v1382 = vsel %vm1379, %v1381, %v1377
    %v1383 = vmul.f32 1.0, %v1382
    %v1384 = vsel %vm144, %v1364, %v1383
    %v1385 = vmul.f32 %v1384, %v1224
    %1387 = vrot.lane.b32.xlu0 %v1384, 64
    %v1388 = vpop.permute.xlu0 %1387
    %v1390 = vmul.f32 %v1384, %v1388
    %1392 = vrot.lane.b32.xlu0 %v1390, 32
    %v1393 = vpop.permute.xlu0 %1392
    %v1395 = vadd.f32 %v1385, %v1393
    %v1396 = vtanh.pop %v1395
    %1398 = vrot.lane.b32.xlu0 %v1396, 64
    %v1399 = vpop.permute.xlu0 %1398
    %v1401 = vmul.f32 %v1384, %v1399
    %1403 = vrot.lane.b32.xlu0 %v1401, 32
    %v1404 = vpop.permute.xlu0 %1403
    %1406 = vrot.lane.b32.xlu0 %v1332, 96
    %v1407 = vpop.permute.xlu0 %1406
    %v1409 = vsel %vm115, %v1404, %v1407
    %v1411 = vsel %vm201, %v1409, 0
    %1413 = vmatpush.msra.mxu0 0.0
    %1414 = vmatpush.msra.mxu0 0.0
    %1415 = vmatpush.msra.mxu0 0.0
    %1416 = vmatpush.msra.mxu0 0.0
    %1417 = vmatpush.msra.mxu0 %v107
    %1418 = vmatpush.msra.mxu0 %v105
    %1419 = vmatpush.msra.mxu0 %v103
    %1420 = vmatpush.msra.mxu0 %v101
    %1421 = vmatpush.msra.mxu0 %v99
    %1422 = vmatpush.msra.mxu0 %v97
    %1423 = vmatpush.msra.mxu0 %v95
    %1424 = vmatpush.msra.mxu0 %v93
    %1425 = vmatpush.msra.mxu0 %v91
    %1426 = vmatpush.msra.mxu0 %v89
    %1427 = vmatpush.msra.mxu0 %v87
    %1428 = vmatpush.msra.mxu0 %v85
    %1429 = vmatmul.f32.gmra.mxu0 %v1411
    %v1430 = vpop.f32.mrf.mxu0
    %v1431 = vadd.f32 %v197, %v1430
    %1432 = vdwg.mxu0
    %1433 = vmatpush.msra.mxu0 0.0
    %1434 = vmatpush.msra.mxu0 0.0
    %1435 = vmatpush.msra.mxu0 0.0
    %1436 = vmatpush.msra.mxu0 0.0
    %1437 = vmatpush.msra.mxu0 %v108
    %1438 = vmatpush.msra.mxu0 %v106
    %1439 = vmatpush.msra.mxu0 %v104
    %1440 = vmatpush.msra.mxu0 %v102
    %1441 = vmatpush.msra.mxu0 %v100
    %1442 = vmatpush.msra.mxu0 %v98
    %1443 = vmatpush.msra.mxu0 %v96
    %1444 = vmatpush.msra.mxu0 %v94
    %1445 = vmatpush.msra.mxu0 %v92
    %1446 = vmatpush.msra.mxu0 %v90
    %1447 = vmatpush.msra.mxu0 %v88
    %1448 = vmatpush.msra.mxu0 %v86
    %1449 = vmatmul.f32.gmra.mxu0 %v1411
    %v1450 = vpop.f32.mrf.mxu0
    %v1451 = vadd.f32 %v198, %v1450
    %1452 = vdwg.mxu0
    %v1453 = vtanh.pop %v1431
    %v1454 = vtanh.pop %v1451
    %v1455 = vxor.u32 %v1431, 2147483648
    %v1456 = vxor.u32 %v1451, 2147483648
    %v1457 = vmul.f32 %v1455, 1.442695
    %v1458 = vpow.pop %v1457
    %v1459 = vmul.f32 %v1456, 1.442695
    %v1460 = vpow.pop %v1459
    %v1461 = vadd.f32 %v1458, 1.0
    %v1462 = vadd.f32 %v1460, 1.0
    %v1463 = vrcp.pop %v1461
    %v1464 = vmul.f32 %v1461, %v1463
    %v1465 = vsub.f32 1.0, %v1464
    %v1466 = vmul.f32 %v1463, %v1465
    %v1467 = vadd.f32 %v1463, %v1466
    %vm1468 = vweird.f32 %v1461
    %vm1469 = vweird.f32 %v1463
    %vm1470 = vmor %vm1468, %vm1469
    %v1471 = vsel %vm1470, %v1463, %v1467
    %v1472 = vand.u32 2147483647, %v1461
    %vm1473 = vcmp.eq.f32.partialorder %v1472, 8.507059e+37
    %v1474 = vand.u32 %v1461, 2147483648
    %v1475 = vor.u32 1.1754944e-38, %v1474
    %v1476 = vsel %vm1473, %v1475, %v1471
    %v1477 = vmul.f32 1.0, %v1476
    %v1478 = vrcp.pop %v1462
    %v1479 = vmul.f32 %v1462, %v1478
    %v1480 = vsub.f32 1.0, %v1479
    %v1481 = vmul.f32 %v1478, %v1480
    %v1482 = vadd.f32 %v1478, %v1481
    %vm1483 = vweird.f32 %v1462
    %vm1484 = vweird.f32 %v1478
    %vm1485 = vmor %vm1483, %vm1484
    %v1486 = vsel %vm1485, %v1478, %v1482
    %v1487 = vand.u32 2147483647, %v1462
    %vm1488 = vcmp.eq.f32.partialorder %v1487, 8.507059e+37
    %v1489 = vand.u32 %v1462, 2147483648
    %v1490 = vor.u32 1.1754944e-38, %v1489
    %v1491 = vsel %vm1488, %v1490, %v1486
    %v1492 = vmul.f32 1.0, %v1491
    %v1493 = vsel %vm250, %v1453, %v1477
    %v1494 = vsel %vm251, %v1454, %v1492
    %v1495 = vmul.f32 %v1493, %v1330
    %v1496 = vmul.f32 %v1493, %v1494
    %1498 = vrot.lane.b32.xlu0 %v1496, 64
    %v1499 = vpop.permute.xlu0 %1498
    %v1501 = vadd.f32 %v1495, %v1499
    %v1502 = vtanh.pop %v1501
    %v1503 = vmul.f32 %v1494, %v1502
    %1505 = vrot.lane.b32.xlu0 %v1503, 64
    %v1506 = vpop.permute.xlu0 %1505
    %s1508 = scalar_lea.vmem [#allocation2], 56
    %1509 = vst.msk [vmem:[%s1508] sm:$0xff] %vm311, %v1506
    %1510 = vst.msk [vmem:[#allocation3] sm:$0xff] %vm115, %v1404
    %1512 = vrot.lane.b32.xlu0 %v1395, 96
    %v1513 = vpop.permute.xlu0 %1512
    %1515 = vst.msk [vmem:[#allocation4] sm:$0xff] %vm115, %v1513
    %1516 = vst.msk [vmem:[#allocation5] sm:$0xff] %vm311, %v1506
    %1518 = vrot.lane.b32.xlu0 %v1501, 64
    %v1519 = vpop.permute.xlu0 %1518
    %1521 = vst.msk [vmem:[#allocation6] sm:$0xff] %vm311, %v1519
    %v1522 = vld [vmem:[#allocation2] sm:$0xff]
    %v1523 = vld [vmem:[#allocation2 + $0x8] sm:$0xff]
    %v1524 = vld [vmem:[#allocation2 + $0x10] sm:$0xff]
    %v1525 = vld [vmem:[#allocation2 + $0x18] sm:$0xff]
    %v1526 = vld [vmem:[#allocation2 + $0x20] sm:$0xff]
    %v1527 = vld [vmem:[#allocation2 + $0x28] sm:$0xff]
    %v1528 = vld [vmem:[#allocation2 + $0x30] sm:$0xff]
    %v1529 = vld [vmem:[#allocation2 + $0x38] sm:$0xff]
    %v1530 = vld [vmem:[%s5] sm:$0x1]
    %v1532 = vperm.slane %v1530, 0
    %v1534 = vmul.f32 %v1522, %v1532
    %v1535 = vmul.f32 %v1523, %v1532
    %v1536 = vmul.f32 %v1524, %v1532
    %v1537 = vmul.f32 %v1525, %v1532
    %v1538 = vmul.f32 %v1526, %v1532
    %v1539 = vmul.f32 %v1527, %v1532
    %v1540 = vmul.f32 %v1528, %v1532
    %v1541 = vmul.f32 %v1529, %v1532
    %v1542 = vsel %vm311, %v1534, 0.0
    %1543 = vadd.xlane.f32.xlu0 %v1542
    %v1544 = vpop.xlane.xlu0 %1543
    %v1545 = vsel %vm311, %v1535, 0.0
    %1546 = vadd.xlane.f32.xlu0 %v1545
    %v1547 = vpop.xlane.xlu0 %1546
    %v1548 = vsel %vm311, %v1536, 0.0
    %1549 = vadd.xlane.f32.xlu0 %v1548
    %v1550 = vpop.xlane.xlu0 %1549
    %v1551 = vsel %vm311, %v1537, 0.0
    %1552 = vadd.xlane.f32.xlu0 %v1551
    %v1553 = vpop.xlane.xlu0 %1552
    %v1554 = vsel %vm311, %v1538, 0.0
    %1555 = vadd.xlane.f32.xlu0 %v1554
    %v1556 = vpop.xlane.xlu0 %1555
    %v1557 = vsel %vm311, %v1539, 0.0
    %1558 = vadd.xlane.f32.xlu0 %v1557
    %v1559 = vpop.xlane.xlu0 %1558
    %v1560 = vsel %vm311, %v1540, 0.0
    %1561 = vadd.xlane.f32.xlu0 %v1560
    %v1562 = vpop.xlane.xlu0 %1561
    %v1563 = vsel %vm311, %v1541, 0.0
    %1564 = vadd.xlane.f32.xlu0 %v1563
    %v1565 = vpop.xlane.xlu0 %1564
    %v1566 = vld [vmem:[#allocation12] sm:$0x1]
    %v1568 = vperm.slane %v1566, 0
    %v1570 = vadd.f32 %v1544, %v1568
    %v1571 = vadd.f32 %v1547, %v1568
    %v1572 = vadd.f32 %v1550, %v1568
    %v1573 = vadd.f32 %v1553, %v1568
    %v1574 = vadd.f32 %v1556, %v1568
    %v1575 = vadd.f32 %v1559, %v1568
    %v1576 = vadd.f32 %v1562, %v1568
    %v1577 = vadd.f32 %v1565, %v1568
    %v1578 = vtanh.pop %v1570
    %v1579 = vtanh.pop %v1571
    %v1580 = vtanh.pop %v1572
    %v1581 = vtanh.pop %v1573
    %v1582 = vtanh.pop %v1574
    %v1583 = vtanh.pop %v1575
    %v1584 = vtanh.pop %v1576
    %v1585 = vtanh.pop %v1577
    %s1586 = sld [smem:[#allocation11]]
    %s1587 = smul.u32 0, 8
    %v1588 = vstv %s1587
    %v1589 = vadd.s32 %v1588, 1
    %v1590 = vadd.s32 %v1588, 2
    %v1591 = vadd.s32 %v1588, 3
    %v1592 = vadd.s32 %v1588, 4
    %v1593 = vadd.s32 %v1588, 5
    %v1594 = vadd.s32 %v1588, 6
    %v1595 = vadd.s32 %v1588, 7
    %v1596 = vstv %s1586
    %vm1597 = vcmp.lt.s32.totalorder %v1588, %v1596
    %vm1598 = vcmp.lt.s32.totalorder %v1589, %v1596
    %vm1599 = vcmp.lt.s32.totalorder %v1590, %v1596
    %vm1600 = vcmp.lt.s32.totalorder %v1591, %v1596
    %vm1601 = vcmp.lt.s32.totalorder %v1592, %v1596
    %vm1602 = vcmp.lt.s32.totalorder %v1593, %v1596
    %vm1603 = vcmp.lt.s32.totalorder %v1594, %v1596
    %vm1604 = vcmp.lt.s32.totalorder %v1595, %v1596
    %v1605 = vsel %vm1597, %v1578, -1e+30
    %v1606 = vsel %vm1598, %v1579, -1e+30
    %v1607 = vsel %vm1599, %v1580, -1e+30
    %v1608 = vsel %vm1600, %v1581, -1e+30
    %v1609 = vsel %vm1601, %v1582, -1e+30
    %v1610 = vsel %vm1602, %v1583, -1e+30
    %v1611 = vsel %vm1603, %v1584, -1e+30
    %v1612 = vsel %vm1604, %v1585, -1e+30
    %v1613 = vld [vmem:[#allocation8] sm:$0xff]
    %v1614 = vld [vmem:[#allocation9] sm:$0xff]
    %v1615 = vld [vmem:[#allocation7] sm:$0xff]
    %vm1616 = vcmask 7168
    %v1617 = vsel %vm1616, %v1605, -inf
    %v1618 = vsel %vm1616, %v1606, -inf
    %v1619 = vsel %vm1616, %v1607, -inf
    %v1620 = vsel %vm1616, %v1608, -inf
    %v1621 = vsel %vm1616, %v1609, -inf
    %v1622 = vmax.f32 %v1617, %v1621
    %v1623 = vsel %vm1616, %v1610, -inf
    %v1624 = vmax.f32 %v1618, %v1623
    %v1625 = vsel %vm1616, %v1611, -inf
    %v1626 = vmax.f32 %v1619, %v1625
    %v1627 = vsel %vm1616, %v1612, -inf
    %v1628 = vmax.f32 %v1620, %v1627
    %v1629 = vmax.f32 %v1622, %v1624
    %v1630 = vmax.f32 %v1626, %v1628
    %v1631 = vmax.f32 %v1629, %v1630
    %v1632 = vmax.f32 %v1613, %v1631
    %v1633 = vsub.f32 %v1613, %v1632
    %v1634 = vmul.f32 %v1633, 1.442695
    %v1635 = vpow.pop %v1634
    %v1636 = vsub.f32 %v1605, %v1632
    %v1637 = vsub.f32 %v1606, %v1632
    %v1638 = vsub.f32 %v1607, %v1632
    %v1639 = vsub.f32 %v1608, %v1632
    %v1640 = vsub.f32 %v1609, %v1632
    %v1641 = vsub.f32 %v1610, %v1632
    %v1642 = vsub.f32 %v1611, %v1632
    %v1643 = vsub.f32 %v1612, %v1632
    %v1644 = vmul.f32 %v1636, 1.442695
    %v1645 = vpow.pop %v1644
    %v1646 = vmul.f32 %v1637, 1.442695
    %v1647 = vpow.pop %v1646
    %v1648 = vmul.f32 %v1638, 1.442695
    %v1649 = vpow.pop %v1648
    %v1650 = vmul.f32 %v1639, 1.442695
    %v1651 = vpow.pop %v1650
    %v1652 = vmul.f32 %v1640, 1.442695
    %v1653 = vpow.pop %v1652
    %v1654 = vmul.f32 %v1641, 1.442695
    %v1655 = vpow.pop %v1654
    %v1656 = vmul.f32 %v1642, 1.442695
    %v1657 = vpow.pop %v1656
    %v1658 = vmul.f32 %v1643, 1.442695
    %v1659 = vpow.pop %v1658
    %v1660 = vsel %vm1597, 1, 0
    %v1661 = vsel %vm1598, 1, 0
    %v1662 = vsel %vm1599, 1, 0
    %v1663 = vsel %vm1600, 1, 0
    %v1664 = vsel %vm1601, 1, 0
    %v1665 = vsel %vm1602, 1, 0
    %v1666 = vsel %vm1603, 1, 0
    %v1667 = vsel %vm1604, 1, 0
    %v1668 = vcvt.s32.f32 %v1660
    %v1669 = vcvt.s32.f32 %v1661
    %v1670 = vcvt.s32.f32 %v1662
    %v1671 = vcvt.s32.f32 %v1663
    %v1672 = vcvt.s32.f32 %v1664
    %v1673 = vcvt.s32.f32 %v1665
    %v1674 = vcvt.s32.f32 %v1666
    %v1675 = vcvt.s32.f32 %v1667
    %v1676 = vmul.f32 %v1645, %v1668
    %v1677 = vmul.f32 %v1647, %v1669
    %v1678 = vmul.f32 %v1649, %v1670
    %v1679 = vmul.f32 %v1651, %v1671
    %v1680 = vmul.f32 %v1653, %v1672
    %v1681 = vmul.f32 %v1655, %v1673
    %v1682 = vmul.f32 %v1657, %v1674
    %v1683 = vmul.f32 %v1659, %v1675
    %v1684 = vmul.f32 %v1635, %v1614
    %v1685 = vsel %vm1616, %v1676, 0.0
    %v1686 = vsel %vm1616, %v1677, 0.0
    %v1687 = vadd.f32 %v1685, %v1686
    %v1688 = vsel %vm1616, %v1678, 0.0
    %v1689 = vadd.f32 %v1687, %v1688
    %v1690 = vsel %vm1616, %v1679, 0.0
    %v1691 = vadd.f32 %v1689, %v1690
    %v1692 = vsel %vm1616, %v1680, 0.0
    %v1693 = vadd.f32 %v1691, %v1692
    %v1694 = vsel %vm1616, %v1681, 0.0
    %v1695 = vadd.f32 %v1693, %v1694
    %v1696 = vsel %vm1616, %v1682, 0.0
    %v1697 = vadd.f32 %v1695, %v1696
    %v1698 = vsel %vm1616, %v1683, 0.0
    %v1699 = vadd.f32 %v1697, %v1698
    %v1700 = vadd.f32 %v1684, %v1699
    %1702 = vset.pattern.permute.xlu0 0
    %1703 = vperm.xlu0 %1702, %v1635
    %v1704 = vpop.permute.xlu0 %1703
    %v1706 = vmul.f32 %v1704, %v1615
    %1708 = vset.pattern.permute.xlu0 0
    %1709 = vperm.xlu0 %1708, %v1676
    %v1710 = vpop.permute.xlu0 %1709
    %1713 = vset.pattern.permute.xlu0 0
    %1714 = vperm.xlu0 %1713, %v1677
    %v1715 = vpop.permute.xlu0 %1714
    %1718 = vset.pattern.permute.xlu0 0
    %1719 = vperm.xlu0 %1718, %v1678
    %v1720 = vpop.permute.xlu0 %1719
    %1723 = vset.pattern.permute.xlu0 0
    %1724 = vperm.xlu0 %1723, %v1679
    %v1725 = vpop.permute.xlu0 %1724
    %1728 = vset.pattern.permute.xlu0 0
    %1729 = vperm.xlu0 %1728, %v1680
    %v1730 = vpop.permute.xlu0 %1729
    %1733 = vset.pattern.permute.xlu0 0
    %1734 = vperm.xlu0 %1733, %v1681
    %v1735 = vpop.permute.xlu0 %1734
    %1738 = vset.pattern.permute.xlu0 0
    %1739 = vperm.xlu0 %1738, %v1682
    %v1740 = vpop.permute.xlu0 %1739
    %1743 = vset.pattern.permute.xlu0 0
    %1744 = vperm.xlu0 %1743, %v1683
    %v1745 = vpop.permute.xlu0 %1744
    %v1747 = vmul.f32 %v1710, %v1522
    %v1748 = vmul.f32 %v1715, %v1523
    %v1749 = vmul.f32 %v1720, %v1524
    %v1750 = vmul.f32 %v1725, %v1525
    %v1751 = vmul.f32 %v1730, %v1526
    %v1752 = vmul.f32 %v1735, %v1527
    %v1753 = vmul.f32 %v1740, %v1528
    %v1754 = vmul.f32 %v1745, %v1529
    %v1755 = vsel %vm311, %v1747, 0.0
    %v1756 = vsel %vm311, %v1748, 0.0
    %v1757 = vadd.f32 %v1755, %v1756
    %v1758 = vsel %vm311, %v1749, 0.0
    %v1759 = vadd.f32 %v1757, %v1758
    %v1760 = vsel %vm311, %v1750, 0.0
    %v1761 = vadd.f32 %v1759, %v1760
    %v1762 = vsel %vm311, %v1751, 0.0
    %v1763 = vadd.f32 %v1761, %v1762
    %v1764 = vsel %vm311, %v1752, 0.0
    %v1765 = vadd.f32 %v1763, %v1764
    %v1766 = vsel %vm311, %v1753, 0.0
    %v1767 = vadd.f32 %v1765, %v1766
    %v1768 = vsel %vm311, %v1754, 0.0
    %v1769 = vadd.f32 %v1767, %v1768
    %v1770 = vadd.f32 %v1706, %v1769
    %1771 = vst.msk [vmem:[#allocation8] sm:$0xff] %vm1616, %v1632
    %1772 = vst.msk [vmem:[#allocation9] sm:$0xff] %vm1616, %v1700
    %1773 = vst.msk [vmem:[#allocation7] sm:$0xff] %vm311, %v1770
    // Predicated region
    $region46: #{tpu_custom_call.1} parent=1 // pred_check
      %p1774 = pneg %p67
    $region47: #{tpu_custom_call.1} parent=1 // pred_check_branch
      %1776 = sbr.rel (%p1774) target = $region49
    $region48: #{tpu_custom_call.1} parent=1 // pred_region
      %s1777 = scvt.s32.f32 %s1586
      %v1778 = vstv %s1777
      %v1779 = vmul.f32 %v1700, %v1778
      %1781 = vset.pattern.permute.xlu0 0
      %1782 = vperm.xlu0 %1781, %v1779
      %v1783 = vpop.permute.xlu0 %1782
      %v1785 = vrcp.pop %v1783
      %v1786 = vmul.f32 %v1783, %v1785
      %v1787 = vsub.f32 1.0, %v1786
      %v1788 = vmul.f32 %v1785, %v1787
      %v1789 = vadd.f32 %v1785, %v1788
      %vm1790 = vweird.f32 %v1783
      %vm1791 = vweird.f32 %v1785
      %vm1792 = vmor %vm1790, %vm1791
      %v1793 = vsel %vm1792, %v1785, %v1789
      %v1794 = vand.u32 2147483647, %v1783
      %vm1795 = vcmp.eq.f32.partialorder %v1794, 8.507059e+37
      %v1796 = vand.u32 %v1783, 2147483648
      %v1797 = vor.u32 1.1754944e-38, %v1796
      %v1798 = vsel %vm1795, %v1797, %v1793
      %v1799 = vmul.f32 %v1770, %v1798
      %v1800 = vld [vmem:[%s7] sm:$0xff]
      %v1801 = vld [vmem:[%s7 + $0x8] sm:$0xff]
      %v1802 = vld [vmem:[%s7 + $0x10] sm:$0xff]
      %v1803 = vld [vmem:[%s7 + $0x18] sm:$0xff]
      %v1804 = vld [vmem:[%s7 + $0x20] sm:$0xff]
      %v1805 = vld [vmem:[%s7 + $0x28] sm:$0xff]
      %v1806 = vld [vmem:[%s7 + $0x30] sm:$0xff]
      %v1807 = vld [vmem:[%s7 + $0x38] sm:$0xff]
      %v1808 = vld [vmem:[#allocation13] sm:$0x1]
      %v1810 = vperm.slane %v1808, 0
      %v1813 = vsel %vm311, %v1799, 0
      %1815 = vmatpush.msra.mxu0 0.0
      %1816 = vmatpush.msra.mxu0 0.0
      %1817 = vmatpush.msra.mxu0 0.0
      %1818 = vmatpush.msra.mxu0 0.0
      %1819 = vmatpush.msra.mxu0 0.0
      %1820 = vmatpush.msra.mxu0 0.0
      %1821 = vmatpush.msra.mxu0 0.0
      %1822 = vmatpush.msra.mxu0 0.0
      %1823 = vmatpush.msra.mxu0 %v1807
      %1824 = vmatpush.msra.mxu0 %v1806
      %1825 = vmatpush.msra.mxu0 %v1805
      %1826 = vmatpush.msra.mxu0 %v1804
      %1827 = vmatpush.msra.mxu0 %v1803
      %1828 = vmatpush.msra.mxu0 %v1802
      %1829 = vmatpush.msra.mxu0 %v1801
      %1830 = vmatpush.msra.mxu0 %v1800
      %1831 = vmatmul.f32.gmra.mxu0 %v1813
      %v1832 = vpop.f32.mrf.mxu0
      %v1833 = vadd.f32 %v1810, %v1832
      %1834 = vdwg.mxu0
      %1835 = vst.msk [vmem:[%s9] sm:$0xff] %vm1616, %v1833
    $region49: #{tpu_custom_call.1} parent=1 // pred_fallthru
      _
    // Predicated region
    $region50: #{tpu_custom_call.1} parent=1 // pred_check
      _
    $region51: #{tpu_custom_call.1} parent=1 // pred_check_branch
      %1837 = sbr.rel (0) target = $region53
    $region52: #{tpu_custom_call.1} parent=1 // pred_region
      _
    $region53: #{tpu_custom_call.1} parent=1 // pred_fallthru
      _
    // Predicated region
    $region54: #{tpu_custom_call.1} parent=1 // pred_check
      _
    $region55: #{tpu_custom_call.1} parent=1 // pred_check_branch
      %1839 = sbr.rel (0) target = $region57
    $region56: #{tpu_custom_call.1} parent=1 // pred_region
      _
    $region57: #{tpu_custom_call.1} parent=1 // pred_fallthru
      _
    %1840 = vsyncpa [#allocation15], 1
    %1841 = vsyncpa [#allocation17], 1

</llo_original>
